<compile_context>
chip_gen: v6e
topology: v6e:2x2x1
jax: 0.10.0
libtpu: 0.0.40
codegen_flags: <defaults>
</compile_context>

<pallas_src>
import math
import functools

import jax
import jax.numpy as jnp
from jax.experimental import pallas as pl
from jax.experimental.pallas import tpu as pltpu


def _self_attention_kernel(x_ref, w_qkv_ref, b_qkv_ref, w_proj_ref, b_proj_ref,
                           o_ref, *, n_head, seq_len, batch_block):
    # x_ref:      (M, C)    M = batch_block * T   (batch fused only for the projections)
    # w_qkv_ref:  (C, 3C)   original c_attn layout; Q columns pre-scaled by 1/sqrt(hd)
    # b_qkv_ref:  (1, 3C)
    # w_proj_ref: (C, C)    c_proj weight, (in_features, out_features)
    # b_proj_ref: (1, C)
    # o_ref:      (M, C)
    H = n_head
    T = seq_len
    bb = batch_block
    M, C = x_ref.shape
    hd = C // H
    cdt = x_ref.dtype            # MXU operand dtype (bf16 recommended at prod sizes)

    # ---- [1] fused QKV projection: one full-width matmul, f32 accumulation ----
    x = x_ref[...]
    qkv = jnp.dot(x, w_qkv_ref[...], preferred_element_type=jnp.float32)
    qkv = (qkv + b_qkv_ref[...].astype(jnp.float32)).astype(cdt)      # (M, 3C)

    w_proj = w_proj_ref[...]                                          # (C, C), hoisted
    b_out = b_proj_ref[...].astype(jnp.float32)                       # (1, C), hoisted

    # ---- per-batch, per-head attention (no cross-batch mask needed) ----
    for b in range(bb):                       # static; bb == 1 by default
        r0 = b * T
        acc = jnp.zeros((T, C), jnp.float32)  # [3] single f32 output accumulator
        for h in range(H):                    # static unroll; slices are lane views
            c0 = h * hd
            q = qkv[r0:r0 + T, c0:c0 + hd]                            # (T, hd)
            k = qkv[r0:r0 + T, C + c0:C + c0 + hd]                    # (T, hd)
            v = qkv[r0:r0 + T, 2 * C + c0:2 * C + c0 + hd]            # (T, hd)

            # scores: scale already folded into Q weights/bias on the host
            s = jnp.einsum('qd,kd->qk', q, k,
                           preferred_element_type=jnp.float32)        # (T, T)

            # numerically-stable softmax pieces in f32 (v5e-safe)
            s = s - jnp.max(s, axis=-1, keepdims=True)
            p = jnp.exp(s)                                            # un-normalized
            l = jnp.sum(p, axis=-1, keepdims=True)                    # (T, 1)

            # ---- [4] PV on un-normalized probs, normalize the small result ----
            o = jnp.dot(p.astype(cdt), v,
                        preferred_element_type=jnp.float32)           # (T, hd)
            o = o * pl.reciprocal(l, approx=True)                     # EUP slot

            # ---- [3] per-head output projection accumulated into (T, C) ----
            acc = acc + jnp.dot(o.astype(cdt), w_proj[c0:c0 + hd, :],
                                preferred_element_type=jnp.float32)   # (T, C)

        y = acc + b_out
        if bb == 1:
            o_ref[...] = y.astype(o_ref.dtype)
        else:
            o_ref[r0:r0 + T, :] = y.astype(o_ref.dtype)


def self_attention(x, w_attn, b_attn, w_proj, b_proj, *, n_head,
                   batch_block=1, compute_dtype=None):
    """x: (B, T, C); weights stored as (in_features, out_features). Returns (B, T, C).

    batch_block: batches processed per grid step (projections fuse bb*T rows;
                 attention stays strictly per-batch -> no masking waste).
    compute_dtype: optional dtype for MXU operands (e.g. jnp.bfloat16 on v6e/v7x).
    """
    B, T, C = x.shape
    H = n_head
    assert C % H == 0
    hd = C // H
    scale = 1.0 / math.sqrt(hd)

    bb = batch_block
    assert B % bb == 0
    assert (bb * T) % 8 == 0 or bb * T == B * T, "row block must be sublane-aligned"

    if compute_dtype is not None:
        x = x.astype(compute_dtype)
        w_attn = w_attn.astype(compute_dtype)
        b_attn = b_attn.astype(compute_dtype)
        w_proj = w_proj.astype(compute_dtype)
        b_proj = b_proj.astype(compute_dtype)

    # ---- host-side (free) prep: fold 1/sqrt(hd) into the Q columns / Q bias ----
    col_scale = jnp.concatenate(
        [jnp.full((C,), scale, dtype=w_attn.dtype),
         jnp.ones((2 * C,), dtype=w_attn.dtype)])
    w_qkv = w_attn * col_scale[None, :]                     # (C, 3C)
    b_qkv = (b_attn * col_scale).reshape(1, 3 * C)          # (1, 3C)
    b_proj2 = b_proj.reshape(1, C)                          # (1, C)

    x_flat = x.reshape(B * T, C)

    kernel = functools.partial(_self_attention_kernel,
                               n_head=H, seq_len=T, batch_block=bb)

    out = pl.pallas_call(
        kernel,
        out_shape=jax.ShapeDtypeStruct((B * T, C), x.dtype),
        grid_spec=pltpu.PrefetchScalarGridSpec(
            num_scalar_prefetch=0,
            grid=(B // bb,),                                # >= 2 steps: pipelining + v7x 2-TC
            in_specs=[
                pl.BlockSpec((bb * T, C), lambda i: (i, 0)),
                # grid-invariant weight blocks (constant index maps):
                pl.BlockSpec((C, 3 * C), lambda i: (0, 0)),
                pl.BlockSpec((1, 3 * C), lambda i: (0, 0)),
                pl.BlockSpec((C, C), lambda i: (0, 0)),
                pl.BlockSpec((1, C), lambda i: (0, 0)),
            ],
            # lane-dense (bb*T, C) output slab per grid step (C >= 128 -> unmasked vst)
            out_specs=pl.BlockSpec((bb * T, C), lambda i: (i, 0)),
        ),
        compiler_params=pltpu.CompilerParams(
            dimension_semantics=("parallel",),
            # conservative budget that also fits v7x's 64 MiB physical VMEM
            vmem_limit_bytes=32 * 1024 * 1024,
        ),
    )(x_flat, w_qkv, b_qkv, w_proj, b_proj2)

    return out.reshape(B, T, C)


def _reference(x, w_attn, b_attn, w_proj, b_proj, n_head):
    B, T, C = x.shape
    hd = C // n_head
    qkv = x @ w_attn + b_attn
    q, k, v = jnp.split(qkv, 3, axis=-1)
    q = q.reshape(B, T, n_head, hd).transpose(0, 2, 1, 3)
    k = k.reshape(B, T, n_head, hd).transpose(0, 2, 1, 3)
    v = v.reshape(B, T, n_head, hd).transpose(0, 2, 1, 3)
    attn = jnp.einsum("bhtd,bhsd->bhts", q, k) * (1.0 / math.sqrt(hd))
    attn = jax.nn.softmax(attn, axis=-1)
    o = jnp.einsum("bhts,bhsd->bhtd", attn, v)
    o = o.transpose(0, 2, 1, 3).reshape(B, T, C)
    return o @ w_proj + b_proj


if __name__ == "__main__":
    # Small but lane-dense config: n_embd=128, n_head=4 (head_dim=32), B=2, T=8.
    B, T, C, n_head = 2, 8, 128, 4

    key = jax.random.PRNGKey(0)
    kx, kwa, kba, kwp, kbp = jax.random.split(key, 5)

    x = jax.random.normal(kx, (B, T, C), dtype=jnp.float32)
    w_attn = jax.random.normal(kwa, (C, 3 * C), dtype=jnp.float32) * (1.0 / math.sqrt(C))
    b_attn = jax.random.normal(kba, (3 * C,), dtype=jnp.float32) * 0.02
    w_proj = jax.random.normal(kwp, (C, C), dtype=jnp.float32) * (1.0 / math.sqrt(C))
    b_proj = jax.random.normal(kbp, (C,), dtype=jnp.float32) * 0.02

    out = self_attention(x, w_attn, b_attn, w_proj, b_proj, n_head=n_head)
    out = jax.block_until_ready(out)

    ref = _reference(x, w_attn, b_attn, w_proj, b_proj, n_head)
    assert out.shape == (B, T, C)
    # tolerance covers the approx (EUP) reciprocal used for softmax normalization
    assert jnp.allclose(out, ref, atol=1e-2, rtol=1e-2), "mismatch vs reference"

    print("KERNEL_OK")
</pallas_src>

<mosaic_0001>
module attributes {stable_mosaic.version = 11 : i64} {
  func.func @_self_attention_kernel(%arg0: i32, %arg1: memref<8x128xf32, #tpu.memory_space<vmem>>, %arg2: memref<128x384xf32, #tpu.memory_space<vmem>>, %arg3: memref<1x384xf32, #tpu.memory_space<vmem>>, %arg4: memref<128x128xf32, #tpu.memory_space<vmem>>, %arg5: memref<1x128xf32, #tpu.memory_space<vmem>>, %arg6: memref<8x128xf32, #tpu.memory_space<vmem>>) attributes {dimension_semantics = [#tpu.dimension_semantics<parallel>], iteration_bounds = array<i64: 2>, scalar_prefetch = 0 : i64, scratch_operands = 0 : i64, tpu.core_type = #tpu.core_type<tc>, window_params = [{transform_indices = @transform_0, window_bounds = array<i64: 8, 128>}, {pipeline_mode = #tpu.pipeline_mode<synchronous>, transform_indices = @transform_1, window_bounds = array<i64: 128, 384>}, {pipeline_mode = #tpu.pipeline_mode<synchronous>, transform_indices = @transform_2, window_bounds = array<i64: 1, 384>}, {pipeline_mode = #tpu.pipeline_mode<synchronous>, transform_indices = @transform_3, window_bounds = array<i64: 128, 128>}, {pipeline_mode = #tpu.pipeline_mode<synchronous>, transform_indices = @transform_4, window_bounds = array<i64: 1, 128>}, {transform_indices = @transform_5, window_bounds = array<i64: 8, 128>}]} {
    %c0 = arith.constant 0 : index
    %c0_0 = arith.constant 0 : index
    %0 = vector.load %arg1[%c0, %c0_0] : memref<8x128xf32, #tpu.memory_space<vmem>>, vector<8x128xf32>
    %c0_1 = arith.constant 0 : index
    %c0_2 = arith.constant 0 : index
    %1 = vector.load %arg2[%c0_1, %c0_2] : memref<128x384xf32, #tpu.memory_space<vmem>>, vector<128x384xf32>
    %cst = arith.constant dense<0.000000e+00> : vector<8x384xf32>
    %2 = tpu.matmul %0, %1, %cst {dimension_numbers = #tpu.dot_dimension_numbers<[1], [0], [0], [1], [0, 0, 1, 1], [], []>} : vector<8x128xf32>, vector<128x384xf32>, vector<8x384xf32> -> vector<8x384xf32>
    %c0_3 = arith.constant 0 : index
    %c0_4 = arith.constant 0 : index
    %3 = vector.load %arg3[%c0_3, %c0_4] : memref<1x384xf32, #tpu.memory_space<vmem>>, vector<1x384xf32>
    %4 = vector.broadcast %3 : vector<1x384xf32> to vector<8x384xf32>
    %5 = arith.addf %2, %4 : vector<8x384xf32>
    %c0_5 = arith.constant 0 : index
    %c0_6 = arith.constant 0 : index
    %6 = vector.load %arg4[%c0_5, %c0_6] : memref<128x128xf32, #tpu.memory_space<vmem>>, vector<128x128xf32>
    %c0_7 = arith.constant 0 : index
    %c0_8 = arith.constant 0 : index
    %7 = vector.load %arg5[%c0_7, %c0_8] : memref<1x128xf32, #tpu.memory_space<vmem>>, vector<1x128xf32>
    %cst_9 = arith.constant 0.000000e+00 : f32
    %8 = vector.broadcast %cst_9 : f32 to vector<8x128xf32>
    %9 = vector.extract_strided_slice %5 {offsets = [0, 0], sizes = [8, 32], strides = [1, 1]} : vector<8x384xf32> to vector<8x32xf32>
    %10 = vector.extract_strided_slice %5 {offsets = [0, 128], sizes = [8, 32], strides = [1, 1]} : vector<8x384xf32> to vector<8x32xf32>
    %11 = vector.extract_strided_slice %5 {offsets = [0, 256], sizes = [8, 32], strides = [1, 1]} : vector<8x384xf32> to vector<8x32xf32>
    "tpu.trace_start"() <{level = 10 : i32, message = "qd,kd->qk"}> : () -> ()
    %cst_10 = arith.constant dense<0.000000e+00> : vector<8x8xf32>
    %12 = tpu.matmul %9, %10, %cst_10 {dimension_numbers = #tpu.dot_dimension_numbers<[1], [1], [0], [0], [0, 0, 1, 0], [], []>} : vector<8x32xf32>, vector<8x32xf32>, vector<8x8xf32> -> vector<8x8xf32>
    "tpu.trace_stop"() : () -> ()
    %cst_11 = arith.constant dense<0xFF800000> : vector<8xf32>
    %13 = vector.multi_reduction <maximumf>, %12, %cst_11 [1] : vector<8x8xf32> to vector<8xf32>
    %14 = vector.shape_cast %13 : vector<8xf32> to vector<8x1xf32>
    %15 = vector.broadcast %14 : vector<8x1xf32> to vector<8x8xf32>
    %16 = arith.subf %12, %15 : vector<8x8xf32>
    %17 = math.exp %16 : vector<8x8xf32>
    %cst_12 = arith.constant dense<0.000000e+00> : vector<8xf32>
    %18 = vector.multi_reduction <add>, %17, %cst_12 [1] : vector<8x8xf32> to vector<8xf32>
    %19 = vector.shape_cast %18 : vector<8xf32> to vector<8x1xf32>
    %cst_13 = arith.constant dense<0.000000e+00> : vector<8x32xf32>
    %20 = tpu.matmul %17, %11, %cst_13 {dimension_numbers = #tpu.dot_dimension_numbers<[1], [0], [0], [1], [0, 0, 1, 1], [], []>} : vector<8x8xf32>, vector<8x32xf32>, vector<8x32xf32> -> vector<8x32xf32>
    %21 = tpu.reciprocal %19 {approx = true} : vector<8x1xf32> -> vector<8x1xf32>
    %22 = vector.broadcast %21 : vector<8x1xf32> to vector<8x32xf32>
    %23 = arith.mulf %20, %22 : vector<8x32xf32>
    %24 = vector.extract_strided_slice %6 {offsets = [0, 0], sizes = [32, 128], strides = [1, 1]} : vector<128x128xf32> to vector<32x128xf32>
    %cst_14 = arith.constant dense<0.000000e+00> : vector<8x128xf32>
    %25 = tpu.matmul %23, %24, %cst_14 {dimension_numbers = #tpu.dot_dimension_numbers<[1], [0], [0], [1], [0, 0, 1, 1], [], []>} : vector<8x32xf32>, vector<32x128xf32>, vector<8x128xf32> -> vector<8x128xf32>
    %26 = arith.addf %8, %25 : vector<8x128xf32>
    %27 = vector.extract_strided_slice %5 {offsets = [0, 32], sizes = [8, 32], strides = [1, 1]} : vector<8x384xf32> to vector<8x32xf32>
    %28 = vector.extract_strided_slice %5 {offsets = [0, 160], sizes = [8, 32], strides = [1, 1]} : vector<8x384xf32> to vector<8x32xf32>
    %29 = vector.extract_strided_slice %5 {offsets = [0, 288], sizes = [8, 32], strides = [1, 1]} : vector<8x384xf32> to vector<8x32xf32>
    "tpu.trace_start"() <{level = 10 : i32, message = "qd,kd->qk"}> : () -> ()
    %cst_15 = arith.constant dense<0.000000e+00> : vector<8x8xf32>
    %30 = tpu.matmul %27, %28, %cst_15 {dimension_numbers = #tpu.dot_dimension_numbers<[1], [1], [0], [0], [0, 0, 1, 0], [], []>} : vector<8x32xf32>, vector<8x32xf32>, vector<8x8xf32> -> vector<8x8xf32>
    "tpu.trace_stop"() : () -> ()
    %cst_16 = arith.constant dense<0xFF800000> : vector<8xf32>
    %31 = vector.multi_reduction <maximumf>, %30, %cst_16 [1] : vector<8x8xf32> to vector<8xf32>
    %32 = vector.shape_cast %31 : vector<8xf32> to vector<8x1xf32>
    %33 = vector.broadcast %32 : vector<8x1xf32> to vector<8x8xf32>
    %34 = arith.subf %30, %33 : vector<8x8xf32>
    %35 = math.exp %34 : vector<8x8xf32>
    %cst_17 = arith.constant dense<0.000000e+00> : vector<8xf32>
    %36 = vector.multi_reduction <add>, %35, %cst_17 [1] : vector<8x8xf32> to vector<8xf32>
    %37 = vector.shape_cast %36 : vector<8xf32> to vector<8x1xf32>
    %cst_18 = arith.constant dense<0.000000e+00> : vector<8x32xf32>
    %38 = tpu.matmul %35, %29, %cst_18 {dimension_numbers = #tpu.dot_dimension_numbers<[1], [0], [0], [1], [0, 0, 1, 1], [], []>} : vector<8x8xf32>, vector<8x32xf32>, vector<8x32xf32> -> vector<8x32xf32>
    %39 = tpu.reciprocal %37 {approx = true} : vector<8x1xf32> -> vector<8x1xf32>
    %40 = vector.broadcast %39 : vector<8x1xf32> to vector<8x32xf32>
    %41 = arith.mulf %38, %40 : vector<8x32xf32>
    %42 = vector.extract_strided_slice %6 {offsets = [32, 0], sizes = [32, 128], strides = [1, 1]} : vector<128x128xf32> to vector<32x128xf32>
    %cst_19 = arith.constant dense<0.000000e+00> : vector<8x128xf32>
    %43 = tpu.matmul %41, %42, %cst_19 {dimension_numbers = #tpu.dot_dimension_numbers<[1], [0], [0], [1], [0, 0, 1, 1], [], []>} : vector<8x32xf32>, vector<32x128xf32>, vector<8x128xf32> -> vector<8x128xf32>
    %44 = arith.addf %26, %43 : vector<8x128xf32>
    %45 = vector.extract_strided_slice %5 {offsets = [0, 64], sizes = [8, 32], strides = [1, 1]} : vector<8x384xf32> to vector<8x32xf32>
    %46 = vector.extract_strided_slice %5 {offsets = [0, 192], sizes = [8, 32], strides = [1, 1]} : vector<8x384xf32> to vector<8x32xf32>
    %47 = vector.extract_strided_slice %5 {offsets = [0, 320], sizes = [8, 32], strides = [1, 1]} : vector<8x384xf32> to vector<8x32xf32>
    "tpu.trace_start"() <{level = 10 : i32, message = "qd,kd->qk"}> : () -> ()
    %cst_20 = arith.constant dense<0.000000e+00> : vector<8x8xf32>
    %48 = tpu.matmul %45, %46, %cst_20 {dimension_numbers = #tpu.dot_dimension_numbers<[1], [1], [0], [0], [0, 0, 1, 0], [], []>} : vector<8x32xf32>, vector<8x32xf32>, vector<8x8xf32> -> vector<8x8xf32>
    "tpu.trace_stop"() : () -> ()
    %cst_21 = arith.constant dense<0xFF800000> : vector<8xf32>
    %49 = vector.multi_reduction <maximumf>, %48, %cst_21 [1] : vector<8x8xf32> to vector<8xf32>
    %50 = vector.shape_cast %49 : vector<8xf32> to vector<8x1xf32>
    %51 = vector.broadcast %50 : vector<8x1xf32> to vector<8x8xf32>
    %52 = arith.subf %48, %51 : vector<8x8xf32>
    %53 = math.exp %52 : vector<8x8xf32>
    %cst_22 = arith.constant dense<0.000000e+00> : vector<8xf32>
    %54 = vector.multi_reduction <add>, %53, %cst_22 [1] : vector<8x8xf32> to vector<8xf32>
    %55 = vector.shape_cast %54 : vector<8xf32> to vector<8x1xf32>
    %cst_23 = arith.constant dense<0.000000e+00> : vector<8x32xf32>
    %56 = tpu.matmul %53, %47, %cst_23 {dimension_numbers = #tpu.dot_dimension_numbers<[1], [0], [0], [1], [0, 0, 1, 1], [], []>} : vector<8x8xf32>, vector<8x32xf32>, vector<8x32xf32> -> vector<8x32xf32>
    %57 = tpu.reciprocal %55 {approx = true} : vector<8x1xf32> -> vector<8x1xf32>
    %58 = vector.broadcast %57 : vector<8x1xf32> to vector<8x32xf32>
    %59 = arith.mulf %56, %58 : vector<8x32xf32>
    %60 = vector.extract_strided_slice %6 {offsets = [64, 0], sizes = [32, 128], strides = [1, 1]} : vector<128x128xf32> to vector<32x128xf32>
    %cst_24 = arith.constant dense<0.000000e+00> : vector<8x128xf32>
    %61 = tpu.matmul %59, %60, %cst_24 {dimension_numbers = #tpu.dot_dimension_numbers<[1], [0], [0], [1], [0, 0, 1, 1], [], []>} : vector<8x32xf32>, vector<32x128xf32>, vector<8x128xf32> -> vector<8x128xf32>
    %62 = arith.addf %44, %61 : vector<8x128xf32>
    %63 = vector.extract_strided_slice %5 {offsets = [0, 96], sizes = [8, 32], strides = [1, 1]} : vector<8x384xf32> to vector<8x32xf32>
    %64 = vector.extract_strided_slice %5 {offsets = [0, 224], sizes = [8, 32], strides = [1, 1]} : vector<8x384xf32> to vector<8x32xf32>
    %65 = vector.extract_strided_slice %5 {offsets = [0, 352], sizes = [8, 32], strides = [1, 1]} : vector<8x384xf32> to vector<8x32xf32>
    "tpu.trace_start"() <{level = 10 : i32, message = "qd,kd->qk"}> : () -> ()
    %cst_25 = arith.constant dense<0.000000e+00> : vector<8x8xf32>
    %66 = tpu.matmul %63, %64, %cst_25 {dimension_numbers = #tpu.dot_dimension_numbers<[1], [1], [0], [0], [0, 0, 1, 0], [], []>} : vector<8x32xf32>, vector<8x32xf32>, vector<8x8xf32> -> vector<8x8xf32>
    "tpu.trace_stop"() : () -> ()
    %cst_26 = arith.constant dense<0xFF800000> : vector<8xf32>
    %67 = vector.multi_reduction <maximumf>, %66, %cst_26 [1] : vector<8x8xf32> to vector<8xf32>
    %68 = vector.shape_cast %67 : vector<8xf32> to vector<8x1xf32>
    %69 = vector.broadcast %68 : vector<8x1xf32> to vector<8x8xf32>
    %70 = arith.subf %66, %69 : vector<8x8xf32>
    %71 = math.exp %70 : vector<8x8xf32>
    %cst_27 = arith.constant dense<0.000000e+00> : vector<8xf32>
    %72 = vector.multi_reduction <add>, %71, %cst_27 [1] : vector<8x8xf32> to vector<8xf32>
    %73 = vector.shape_cast %72 : vector<8xf32> to vector<8x1xf32>
    %cst_28 = arith.constant dense<0.000000e+00> : vector<8x32xf32>
    %74 = tpu.matmul %71, %65, %cst_28 {dimension_numbers = #tpu.dot_dimension_numbers<[1], [0], [0], [1], [0, 0, 1, 1], [], []>} : vector<8x8xf32>, vector<8x32xf32>, vector<8x32xf32> -> vector<8x32xf32>
    %75 = tpu.reciprocal %73 {approx = true} : vector<8x1xf32> -> vector<8x1xf32>
    %76 = vector.broadcast %75 : vector<8x1xf32> to vector<8x32xf32>
    %77 = arith.mulf %74, %76 : vector<8x32xf32>
    %78 = vector.extract_strided_slice %6 {offsets = [96, 0], sizes = [32, 128], strides = [1, 1]} : vector<128x128xf32> to vector<32x128xf32>
    %cst_29 = arith.constant dense<0.000000e+00> : vector<8x128xf32>
    %79 = tpu.matmul %77, %78, %cst_29 {dimension_numbers = #tpu.dot_dimension_numbers<[1], [0], [0], [1], [0, 0, 1, 1], [], []>} : vector<8x32xf32>, vector<32x128xf32>, vector<8x128xf32> -> vector<8x128xf32>
    %80 = arith.addf %62, %79 : vector<8x128xf32>
    %81 = vector.broadcast %7 : vector<1x128xf32> to vector<8x128xf32>
    %82 = arith.addf %80, %81 : vector<8x128xf32>
    %c0_30 = arith.constant 0 : index
    %c0_31 = arith.constant 0 : index
    %83 = vector.load %arg6[%c0_30, %c0_31] : memref<8x128xf32, #tpu.memory_space<vmem>>, vector<8x128xf32>
    tpu.vector_store %arg6[%c0_30, %c0_31], %82 {strides = array<i32>} : memref<8x128xf32, #tpu.memory_space<vmem>>, vector<8x128xf32>,
    return
  }
  func.func @transform_0(%arg0: i32) -> (i32, i32) {
    %c0_i32 = arith.constant 0 : i32
    %c0_i32_0 = arith.constant 0 : i32
    return %arg0, %c0_i32 : i32, i32
  }
  func.func @transform_1(%arg0: i32) -> (i32, i32) {
    %c0_i32 = arith.constant 0 : i32
    %c0_i32_0 = arith.constant 0 : i32
    %c0_i32_1 = arith.constant 0 : i32
    return %c0_i32, %c0_i32_0 : i32, i32
  }
  func.func @transform_2(%arg0: i32) -> (i32, i32) {
    %c0_i32 = arith.constant 0 : i32
    %c0_i32_0 = arith.constant 0 : i32
    %c0_i32_1 = arith.constant 0 : i32
    return %c0_i32, %c0_i32_0 : i32, i32
  }
  func.func @transform_3(%arg0: i32) -> (i32, i32) {
    %c0_i32 = arith.constant 0 : i32
    %c0_i32_0 = arith.constant 0 : i32
    %c0_i32_1 = arith.constant 0 : i32
    return %c0_i32, %c0_i32_0 : i32, i32
  }
  func.func @transform_4(%arg0: i32) -> (i32, i32) {
    %c0_i32 = arith.constant 0 : i32
    %c0_i32_0 = arith.constant 0 : i32
    %c0_i32_1 = arith.constant 0 : i32
    return %c0_i32, %c0_i32_0 : i32, i32
  }
  func.func @transform_5(%arg0: i32) -> (i32, i32) {
    %c0_i32 = arith.constant 0 : i32
    %c0_i32_0 = arith.constant 0 : i32
    return %arg0, %c0_i32 : i32, i32
  }
}

</mosaic_0001>

<llo_original>
// kernel: tpu_custom_call.1
$region0: #{tpu_custom_call.1}
  #allocation0 [shape = 'u32[]', space=smem, size = 0x4, offset = 0x4, fixed_abs, tag = 'smem constant byte address 0x4 - core index']
  #allocation1 [shape = 'u32[144,128]{1,0:T(1,128)}', space=vmem, size = 0x12000, scoped, tag = 'internal scratch']
  %s0 = inlined_call_operand.hbm [shape: f32[16,128], index: 0, kind: input, shape index: {}]
  %s1 = inlined_call_operand.hbm [shape: f32[128,384], index: 1, kind: input, shape index: {}]
  %s2 = inlined_call_operand.vmem [shape: f32[1,384], index: 2, kind: input, shape index: {}]
  %s3 = inlined_call_operand.hbm [shape: f32[128,128], index: 3, kind: input, shape index: {}]
  %s4 = inlined_call_operand.vmem [shape: f32[1,128], index: 4, kind: input, shape index: {}]
  %s5 = inlined_call_operand.hbm [shape: f32[16,128], index: 5, kind: output, shape index: {}]
  %s6 = sld [smem:[#allocation0]]
  $region65: #{tpu_custom_call.1} parent=0
    _
  %s8 = ssub.s32 1, %s6
  %s9 = scalar_select 0, %s8, %s6
  $region1: #{tpu_custom_call.1} parent=0
    #allocation2 [shape = 'u8[8192]{0}', space=vmem, size = 0x2000, scoped, tag = 'input window, operand 0']
    #allocation3 [shape = 's32[2]{0}', space=sflag, size = 0x8, scoped, tag = 'scoped memory for tpu_custom_call.1']
    #allocation4 [shape = 's32[2]{0}', space=sflag, size = 0x8, scoped, tag = 'scoped memory for tpu_custom_call.1']
    #allocation5 [shape = 'u8[196608]{0}', space=vmem, size = 0x30000, scoped, tag = 'input window, operand 1, single buffered']
    #allocation6 [shape = 's32[1]{0}', space=sflag, size = 0x4, scoped, tag = 'scoped memory for tpu_custom_call.1']
    #allocation7 [shape = 'u8[65536]{0}', space=vmem, size = 0x10000, scoped, tag = 'input window, operand 3, single buffered']
    #allocation8 [shape = 'u8[8192]{0}', space=vmem, size = 0x2000, scoped, tag = 'output window, operand 0']
    %10 = vsyncpa [#allocation3], 0
    %s11 = scalar_lea.sflag [#allocation3], 1
    %12 = vsyncpa %s11, 0
    %13 = vsyncpa [#allocation6], 0
    %14 = vsyncpa [#allocation4], 0
    %s15 = scalar_lea.sflag [#allocation4], 1
    %16 = vsyncpa %s15, 0
    loop: start=0, step=1, limit=4
    $region2: #{tpu_custom_call.1} parent=1 // loop_pre_header
      _
    $region3: #{tpu_custom_call.1} parent=1 // loop_header
      %s18 = sphi 0, %s22
      %p19 = scmp.ge.s32.totalorder %s18, 4
      %s28 = sphi 0, %s30
      %s31 = sphi 0, %s28
      %s32 = sphi 0, %s31
      %s48 = sphi 0, %s32
      %s52 = sphi 0, %s52
      %s54 = sphi 0, %s52
      %s55 = sphi 0, %s54
      %s69 = sphi 0, %s55
      %s73 = sphi 0, %s73
      %s75 = sphi 0, %s73
      %s76 = sphi 0, %s75
      %s90 = sphi 0, %s76
      %s94 = sphi 0, %s94
      %s96 = sphi 0, %s94
      %s97 = sphi 0, %s96
      %s111 = sphi 0, %s97
      %s115 = sphi 0, %s115
      %s117 = sphi 0, %s115
      %s118 = sphi 0, %s117
      %s132 = sphi 0, %s118
      %s138 = sphi 0, %s140
      %s141 = sphi 0, %s138
      %s142 = sphi 0, %s141
      %s158 = sphi 0, %s142
    $region4: #{tpu_custom_call.1} parent=1 // loop_header_branch
      %21 = sbr.rel (%p19) target = $region8
    $region5: #{tpu_custom_call.1} parent=1 // loop_body
      %s23 = ssub.s32 %s18, 1
      %s24 = ssub.s32 %s18, 2
      %s25 = sadd.s32 %s18, 1
      %s26 = ssub.s32 %s18, %s25
      %p27 = scmp.eq.s32.totalorder %s26, 0
      %s29 = sadd.s32 %s28, 1
      %s30 = scalar_select %p27, %s28, %s29
      %p33 = pneg %p27
      %p34 = scmp.eq.s32.totalorder %s18, 1
      %p35 = por %p33, %p34
      %p36 = scmp.ne.s32.totalorder %s28, %s31
      %p37 = scmp.eq.s32.totalorder %s18, 0
      %p38 = por %p36, %p37
      %p39 = scmp.ne.s32.totalorder %s28, %s31
      %p40 = scmp.eq.s32.totalorder %s23, 1
      %p41 = por %p39, %p40
      %p42 = scmp.ne.s32.totalorder %s31, %s32
      %p43 = scmp.eq.s32.totalorder %s23, 0
      %p44 = por %p42, %p43
      %p45 = scmp.ne.s32.totalorder %s31, %s32
      %p46 = scmp.eq.s32.totalorder %s24, 1
      %p47 = por %p45, %p46
      %p49 = scmp.ne.s32.totalorder %s32, %s48
      %p50 = scmp.eq.s32.totalorder %s24, 0
      %p51 = por %p49, %p50
      %s53 = sadd.s32 %s52, 1
      %p56 = scmp.eq.s32.totalorder %s18, 1
      %p57 = scmp.ne.s32.totalorder %s52, %s54
      %p58 = scmp.eq.s32.totalorder %s18, 0
      %p59 = por %p57, %p58
      %p60 = scmp.ne.s32.totalorder %s52, %s54
      %p61 = scmp.eq.s32.totalorder %s23, 1
      %p62 = por %p60, %p61
      %p63 = scmp.ne.s32.totalorder %s54, %s55
      %p64 = scmp.eq.s32.totalorder %s23, 0
      %p65 = por %p63, %p64
      %p66 = scmp.ne.s32.totalorder %s54, %s55
      %p67 = scmp.eq.s32.totalorder %s24, 1
      %p68 = por %p66, %p67
      %p70 = scmp.ne.s32.totalorder %s55, %s69
      %p71 = scmp.eq.s32.totalorder %s24, 0
      %p72 = por %p70, %p71
      %s74 = sadd.s32 %s73, 1
      %p77 = scmp.eq.s32.totalorder %s18, 1
      %p78 = scmp.ne.s32.totalorder %s73, %s75
      %p79 = scmp.eq.s32.totalorder %s18, 0
      %p80 = por %p78, %p79
      %p81 = scmp.ne.s32.totalorder %s73, %s75
      %p82 = scmp.eq.s32.totalorder %s23, 1
      %p83 = por %p81, %p82
      %p84 = scmp.ne.s32.totalorder %s75, %s76
      %p85 = scmp.eq.s32.totalorder %s23, 0
      %p86 = por %p84, %p85
      %p87 = scmp.ne.s32.totalorder %s75, %s76
      %p88 = scmp.eq.s32.totalorder %s24, 1
      %p89 = por %p87, %p88
      %p91 = scmp.ne.s32.totalorder %s76, %s90
      %p92 = scmp.eq.s32.totalorder %s24, 0
      %p93 = por %p91, %p92
      %s95 = sadd.s32 %s94, 1
      %p98 = scmp.eq.s32.totalorder %s18, 1
      %p99 = scmp.ne.s32.totalorder %s94, %s96
      %p100 = scmp.eq.s32.totalorder %s18, 0
      %p101 = por %p99, %p100
      %p102 = scmp.ne.s32.totalorder %s94, %s96
      %p103 = scmp.eq.s32.totalorder %s23, 1
      %p104 = por %p102, %p103
      %p105 = scmp.ne.s32.totalorder %s96, %s97
      %p106 = scmp.eq.s32.totalorder %s23, 0
      %p107 = por %p105, %p106
      %p108 = scmp.ne.s32.totalorder %s96, %s97
      %p109 = scmp.eq.s32.totalorder %s24, 1
      %p110 = por %p108, %p109
      %p112 = scmp.ne.s32.totalorder %s97, %s111
      %p113 = scmp.eq.s32.totalorder %s24, 0
      %p114 = por %p112, %p113
      %s116 = sadd.s32 %s115, 1
      %p119 = scmp.eq.s32.totalorder %s18, 1
      %p120 = scmp.ne.s32.totalorder %s115, %s117
      %p121 = scmp.eq.s32.totalorder %s18, 0
      %p122 = por %p120, %p121
      %p123 = scmp.ne.s32.totalorder %s115, %s117
      %p124 = scmp.eq.s32.totalorder %s23, 1
      %p125 = por %p123, %p124
      %p126 = scmp.ne.s32.totalorder %s117, %s118
      %p127 = scmp.eq.s32.totalorder %s23, 0
      %p128 = por %p126, %p127
      %p129 = scmp.ne.s32.totalorder %s117, %s118
      %p130 = scmp.eq.s32.totalorder %s24, 1
      %p131 = por %p129, %p130
      %p133 = scmp.ne.s32.totalorder %s118, %s132
      %p134 = scmp.eq.s32.totalorder %s24, 0
      %p135 = por %p133, %p134
      %s136 = ssub.s32 %s18, %s25
      %p137 = scmp.eq.s32.totalorder %s136, 0
      %s139 = sadd.s32 %s138, 1
      %s140 = scalar_select %p137, %s138, %s139
      %p143 = pneg %p137
      %p144 = scmp.eq.s32.totalorder %s18, 1
      %p145 = por %p143, %p144
      %p146 = scmp.ne.s32.totalorder %s138, %s141
      %p147 = scmp.eq.s32.totalorder %s18, 0
      %p148 = por %p146, %p147
      %p149 = scmp.ne.s32.totalorder %s138, %s141
      %p150 = scmp.eq.s32.totalorder %s23, 1
      %p151 = por %p149, %p150
      %p152 = scmp.ne.s32.totalorder %s141, %s142
      %p153 = scmp.eq.s32.totalorder %s23, 0
      %p154 = por %p152, %p153
      %p155 = scmp.ne.s32.totalorder %s141, %s142
      %p156 = scmp.eq.s32.totalorder %s24, 1
      %p157 = por %p155, %p156
      %p159 = scmp.ne.s32.totalorder %s142, %s158
      %p160 = scmp.eq.s32.totalorder %s24, 0
      %p161 = por %p159, %p160
      %p162 = scmp.le.s32.totalorder 1, %s18
      %p163 = scmp.lt.s32.totalorder %s18, 3
      %p164 = pnand %p162, %p163
      %p165 = pneg %p164
      // Predicated region
      $region9: #{tpu_custom_call.1} parent=5 // pred_check
        _
      $region10: #{tpu_custom_call.1} parent=5 // pred_check_branch
        %167 = sbr.rel (%p164) target = $region12
      $region11: #{tpu_custom_call.1} parent=5 // pred_region
        %s168 = ssub.s32 %s18, 1
        // Predicated region
        $region13: #{tpu_custom_call.1} parent=11 // pred_check
          %p169 = pneg %p65
        $region14: #{tpu_custom_call.1} parent=11 // pred_check_branch
          %171 = sbr.rel (%p169) target = $region16
        $region15: #{tpu_custom_call.1} parent=11 // pred_region
          %s173 = ssub.s32 6144, 6144
          %174 = vsyncadd [#allocation6], %s173
          %s175 = sshll.u32 [#allocation5], 4
          %s176 = int_to_ptr.vmem [resolvable:$true] %s175
          %181 = dma.hbm_to_vmem [thread:$0]  %s1, 6144, %s176, [#allocation6], 384, 384, 24
        $region16: #{tpu_custom_call.1} parent=11 // pred_fallthru
          _
        // Predicated region
        $region17: #{tpu_custom_call.1} parent=11 // pred_check
          %p182 = pneg %p86
        $region18: #{tpu_custom_call.1} parent=11 // pred_check_branch
          %184 = sbr.rel (%p182) target = $region20
        $region19: #{tpu_custom_call.1} parent=11 // pred_region
          _
        $region20: #{tpu_custom_call.1} parent=11 // pred_fallthru
          _
        // Predicated region
        $region21: #{tpu_custom_call.1} parent=11 // pred_check
          %p185 = pneg %p107
        $region22: #{tpu_custom_call.1} parent=11 // pred_check_branch
          %187 = sbr.rel (%p185) target = $region24
        $region23: #{tpu_custom_call.1} parent=11 // pred_region
          %s189 = ssub.s32 2048, 2048
          %190 = vsyncadd [#allocation6], %s189
          %s191 = sshll.u32 [#allocation7], 4
          %s192 = int_to_ptr.vmem [resolvable:$true] %s191
          %197 = dma.hbm_to_vmem [thread:$0]  %s3, 2048, %s192, [#allocation6], 128, 128, 8
        $region24: #{tpu_custom_call.1} parent=11 // pred_fallthru
          _
        // Predicated region
        $region25: #{tpu_custom_call.1} parent=11 // pred_check
          %p198 = pneg %p128
        $region26: #{tpu_custom_call.1} parent=11 // pred_check_branch
          %200 = sbr.rel (%p198) target = $region28
        $region27: #{tpu_custom_call.1} parent=11 // pred_region
          _
        $region28: #{tpu_custom_call.1} parent=11 // pred_fallthru
          _
      $region12: #{tpu_custom_call.1} parent=5 // pred_fallthru
        _
      %p201 = scmp.lt.s32.totalorder %s18, 2
      // Predicated region
      $region29: #{tpu_custom_call.1} parent=5 // pred_check
        %p202 = pneg %p201
      $region30: #{tpu_custom_call.1} parent=5 // pred_check_branch
        %204 = sbr.rel (%p202) target = $region32
      $region31: #{tpu_custom_call.1} parent=5 // pred_region
        // Predicated region
        $region33: #{tpu_custom_call.1} parent=31 // pred_check
          %p205 = pneg %p38
        $region34: #{tpu_custom_call.1} parent=31 // pred_check_branch
          %207 = sbr.rel (%p205) target = $region36
        $region35: #{tpu_custom_call.1} parent=31 // pred_region
          %s208 = sand.u32 %s28, 1
          %s209 = scalar_lea.sflag [#allocation3], %s208
          %s210 = sand.u32 %s28, 1
          %s211 = smul.addr %s210, 8
          %s212 = scalar_lea.vmem [#allocation2], %s211
          %s214 = ssub.s32 128, 128
          %215 = vsyncadd %s209, %s214
          %s216 = smul.addr %s18, 128
          %s217 = scalar_lea.hbm %s0, %s216
          %s219 = sshll.u32 %s212, 4
          %s220 = int_to_ptr.vmem [resolvable:$true] %s219
          %222 = dma.hbm_to_vmem [thread:$0]  %s217, 128, %s220, %s209
        $region36: #{tpu_custom_call.1} parent=31 // pred_fallthru
          _
      $region32: #{tpu_custom_call.1} parent=5 // pred_fallthru
        _
      %p223 = scmp.le.s32.totalorder 1, %s18
      %p224 = scmp.lt.s32.totalorder %s18, 3
      %p225 = pnand %p223, %p224
      %p226 = pneg %p225
      // Predicated region
      $region37: #{tpu_custom_call.1} parent=5 // pred_check
        _
      $region38: #{tpu_custom_call.1} parent=5 // pred_check_branch
        %228 = sbr.rel (%p225) target = $region40
      $region39: #{tpu_custom_call.1} parent=5 // pred_region
        %s229 = ssub.s32 %s18, 1
        %s230 = sand.u32 %s31, 1
        %s231 = scalar_lea.sflag [#allocation3], %s230
        %s232 = sand.u32 %s31, 1
        %s233 = smul.addr %s232, 8
        %s234 = scalar_lea.vmem [#allocation2], %s233
        // Predicated region
        $region41: #{tpu_custom_call.1} parent=39 // pred_check
          %p235 = pneg %p44
        $region42: #{tpu_custom_call.1} parent=39 // pred_check_branch
          %237 = sbr.rel (%p235) target = $region44
        $region43: #{tpu_custom_call.1} parent=39 // pred_region
          %238 = dma.done %s231, 128
        $region44: #{tpu_custom_call.1} parent=39 // pred_fallthru
          _
        // Predicated region
        $region45: #{tpu_custom_call.1} parent=39 // pred_check
          %p239 = pneg %p65
        $region46: #{tpu_custom_call.1} parent=39 // pred_check_branch
          %241 = sbr.rel (%p239) target = $region48
        $region47: #{tpu_custom_call.1} parent=39 // pred_region
          %242 = dma.done [#allocation6], 6144
        $region48: #{tpu_custom_call.1} parent=39 // pred_fallthru
          _
        // Predicated region
        $region49: #{tpu_custom_call.1} parent=39 // pred_check
          %p243 = pneg %p107
        $region50: #{tpu_custom_call.1} parent=39 // pred_check_branch
          %245 = sbr.rel (%p243) target = $region52
        $region51: #{tpu_custom_call.1} parent=39 // pred_region
          %246 = dma.done [#allocation6], 2048
        $region52: #{tpu_custom_call.1} parent=39 // pred_fallthru
          _
        %s247 = sand.u32 %s31, 1
        %s248 = scalar_lea.sflag [#allocation3], %s247
        %s249 = sand.u32 %s31, 1
        %s250 = smul.addr %s249, 8
        %s251 = scalar_lea.vmem [#allocation2], %s250
        %p252 = pneg %p44
        %p253 = pneg %p41
        %p254 = pneg %p65
        %p255 = pneg %p62
        %p256 = pneg %p86
        %p257 = pneg %p83
        %p258 = pneg %p107
        %p259 = pneg %p104
        %p260 = pneg %p128
        %p261 = pneg %p125
        %p262 = pneg %p154
        %p263 = pneg %p151
        %s264 = sand.u32 %s141, 1
        %s265 = scalar_lea.sflag [#allocation4], %s264
        %s266 = sand.u32 %s141, 1
        %s267 = smul.addr %s266, 8
        %s268 = scalar_lea.vmem [#allocation8], %s267
        %v269 = vld [vmem:[%s234] sm:$0xff]
        %v270 = vld [vmem:[#allocation5] sm:$0xff]
        %v271 = vld [vmem:[#allocation5 + $0x8] sm:$0xff]
        %v272 = vld [vmem:[#allocation5 + $0x10] sm:$0xff]
        %v273 = vld [vmem:[#allocation5 + $0x18] sm:$0xff]
        %v274 = vld [vmem:[#allocation5 + $0x20] sm:$0xff]
        %v275 = vld [vmem:[#allocation5 + $0x28] sm:$0xff]
        %v276 = vld [vmem:[#allocation5 + $0x30] sm:$0xff]
        %v277 = vld [vmem:[#allocation5 + $0x38] sm:$0xff]
        %v278 = vld [vmem:[#allocation5 + $0x40] sm:$0xff]
        %v279 = vld [vmem:[#allocation5 + $0x48] sm:$0xff]
        %v280 = vld [vmem:[#allocation5 + $0x50] sm:$0xff]
        %v281 = vld [vmem:[#allocation5 + $0x58] sm:$0xff]
        %v282 = vld [vmem:[#allocation5 + $0x60] sm:$0xff]
        %v283 = vld [vmem:[#allocation5 + $0x68] sm:$0xff]
        %v284 = vld [vmem:[#allocation5 + $0x70] sm:$0xff]
        %v285 = vld [vmem:[#allocation5 + $0x78] sm:$0xff]
        %v286 = vld [vmem:[#allocation5 + $0x80] sm:$0xff]
        %v287 = vld [vmem:[#allocation5 + $0x88] sm:$0xff]
        %v288 = vld [vmem:[#allocation5 + $0x90] sm:$0xff]
        %v289 = vld [vmem:[#allocation5 + $0x98] sm:$0xff]
        %v290 = vld [vmem:[#allocation5 + $0xa0] sm:$0xff]
        %v291 = vld [vmem:[#allocation5 + $0xa8] sm:$0xff]
        %v292 = vld [vmem:[#allocation5 + $0xb0] sm:$0xff]
        %v293 = vld [vmem:[#allocation5 + $0xb8] sm:$0xff]
        %v294 = vld [vmem:[#allocation5 + $0xc0] sm:$0xff]
        %v295 = vld [vmem:[#allocation5 + $0xc8] sm:$0xff]
        %v296 = vld [vmem:[#allocation5 + $0xd0] sm:$0xff]
        %v297 = vld [vmem:[#allocation5 + $0xd8] sm:$0xff]
        %v298 = vld [vmem:[#allocation5 + $0xe0] sm:$0xff]
        %v299 = vld [vmem:[#allocation5 + $0xe8] sm:$0xff]
        %v300 = vld [vmem:[#allocation5 + $0xf0] sm:$0xff]
        %v301 = vld [vmem:[#allocation5 + $0xf8] sm:$0xff]
        %v302 = vld [vmem:[#allocation5 + $0x100] sm:$0xff]
        %v303 = vld [vmem:[#allocation5 + $0x108] sm:$0xff]
        %v304 = vld [vmem:[#allocation5 + $0x110] sm:$0xff]
        %v305 = vld [vmem:[#allocation5 + $0x118] sm:$0xff]
        %v306 = vld [vmem:[#allocation5 + $0x120] sm:$0xff]
        %v307 = vld [vmem:[#allocation5 + $0x128] sm:$0xff]
        %v308 = vld [vmem:[#allocation5 + $0x130] sm:$0xff]
        %v309 = vld [vmem:[#allocation5 + $0x138] sm:$0xff]
        %v310 = vld [vmem:[#allocation5 + $0x140] sm:$0xff]
        %v311 = vld [vmem:[#allocation5 + $0x148] sm:$0xff]
        %v312 = vld [vmem:[#allocation5 + $0x150] sm:$0xff]
        %v313 = vld [vmem:[#allocation5 + $0x158] sm:$0xff]
        %v314 = vld [vmem:[#allocation5 + $0x160] sm:$0xff]
        %v315 = vld [vmem:[#allocation5 + $0x168] sm:$0xff]
        %v316 = vld [vmem:[#allocation5 + $0x170] sm:$0xff]
        %v317 = vld [vmem:[#allocation5 + $0x178] sm:$0xff]
        %v318 = vld [vmem:[%s2] sm:$0x7]
        %v320 = vlaneseq
        %v321 = vshrl.u32 %v320, 7
        %v322 = vsub.s32 0, %v321
        %v323 = vrot.slane %v318, %v322
        %v324 = vlaneseq
        %v325 = vshrl.u32 %v324, 7
        %v326 = vsub.s32 1, %v325
        %v327 = vrot.slane %v318, %v326
        %v328 = vlaneseq
        %v329 = vshrl.u32 %v328, 7
        %v330 = vsub.s32 2, %v329
        %v331 = vrot.slane %v318, %v330
        %335 = vmatprep.subr.mxu0 %v316
        %336 = vmatpush1.msra.mxu0 %v315
        %337 = vmatprep.subr.mxu0 %v313
        %338 = vmatpush1.msra.mxu0 %v312
        %339 = vmatprep.subr.mxu0 %v310
        %340 = vmatpush1.msra.mxu0 %v309
        %341 = vmatprep.subr.mxu0 %v307
        %342 = vmatpush1.msra.mxu0 %v306
        %343 = vmatprep.subr.mxu0 %v304
        %344 = vmatpush1.msra.mxu0 %v303
        %345 = vmatprep.subr.mxu0 %v301
        %346 = vmatpush1.msra.mxu0 %v300
        %347 = vmatprep.subr.mxu0 %v298
        %348 = vmatpush1.msra.mxu0 %v297
        %349 = vmatprep.subr.mxu0 %v295
        %350 = vmatpush1.msra.mxu0 %v294
        %351 = vmatprep.subr.mxu0 %v292
        %352 = vmatpush1.msra.mxu0 %v291
        %353 = vmatprep.subr.mxu0 %v289
        %354 = vmatpush1.msra.mxu0 %v288
        %355 = vmatprep.subr.mxu0 %v286
        %356 = vmatpush1.msra.mxu0 %v285
        %357 = vmatprep.subr.mxu0 %v283
        %358 = vmatpush1.msra.mxu0 %v282
        %359 = vmatprep.subr.mxu0 %v280
        %360 = vmatpush1.msra.mxu0 %v279
        %361 = vmatprep.subr.mxu0 %v277
        %362 = vmatpush1.msra.mxu0 %v276
        %363 = vmatprep.subr.mxu0 %v274
        %364 = vmatpush1.msra.mxu0 %v273
        %365 = vmatprep.subr.mxu0 %v271
        %366 = vmatpush1.msra.mxu0 %v270
        %367 = vmatprep.subr.mxu0 0.0
        %368 = vmatpush2.msra.mxu0 0.0
        %369 = vmatprep.subr.mxu0 0.0
        %370 = vmatpush2.msra.mxu0 0.0
        %371 = vmatprep.subr.mxu0 0.0
        %372 = vmatpush2.msra.mxu0 0.0
        %373 = vmatprep.subr.mxu0 0.0
        %374 = vmatpush2.msra.mxu0 0.0
        %375 = vmatprep.subr.mxu0 0.0
        %376 = vmatpush2.msra.mxu0 0.0
        %377 = vmatprep.subr.mxu0 0.0
        %378 = vmatpush2.msra.mxu0 0.0
        %379 = vmatprep.subr.mxu0 0.0
        %380 = vmatpush2.msra.mxu0 0.0
        %381 = vmatprep.subr.mxu0 0.0
        %382 = vmatpush2.msra.mxu0 0.0
        %383 = vmatprep.subr.mxu0 0.0
        %384 = vmatpush2.msra.mxu0 0.0
        %385 = vmatprep.subr.mxu0 0.0
        %386 = vmatpush2.msra.mxu0 0.0
        %387 = vmatprep.subr.mxu0 0.0
        %388 = vmatpush2.msra.mxu0 0.0
        %389 = vmatprep.subr.mxu0 0.0
        %390 = vmatpush2.msra.mxu0 0.0
        %391 = vmatprep.subr.mxu0 0.0
        %392 = vmatpush2.msra.mxu0 0.0
        %393 = vmatprep.subr.mxu0 0.0
        %394 = vmatpush2.msra.mxu0 0.0
        %395 = vmatprep.subr.mxu0 0.0
        %396 = vmatpush2.msra.mxu0 0.0
        %397 = vmatprep.subr.mxu0 0.0
        %398 = vmatpush2.msra.mxu0 0.0
        %399 = vmatprep.mubr.f32.mxu0 0.0
        %400 = vmatmul.mubr.f32.gmra.mxu0 %v269
        %v401 = vpop.f32.mrf.mxu0
        %v402 = vadd.f32 %v323, %v401
        %v403 = vpop.f32.mrf.mxu0
        %v404 = vadd.f32 %v327, %v403
        %405 = vdwg.mxu0
        %406 = vmatprep.subr.mxu0 0.0
        %407 = vmatpush1.msra.mxu0 %v317
        %408 = vmatprep.subr.mxu0 0.0
        %409 = vmatpush1.msra.mxu0 %v314
        %410 = vmatprep.subr.mxu0 0.0
        %411 = vmatpush1.msra.mxu0 %v311
        %412 = vmatprep.subr.mxu0 0.0
        %413 = vmatpush1.msra.mxu0 %v308
        %414 = vmatprep.subr.mxu0 0.0
        %415 = vmatpush1.msra.mxu0 %v305
        %416 = vmatprep.subr.mxu0 0.0
        %417 = vmatpush1.msra.mxu0 %v302
        %418 = vmatprep.subr.mxu0 0.0
        %419 = vmatpush1.msra.mxu0 %v299
        %420 = vmatprep.subr.mxu0 0.0
        %421 = vmatpush1.msra.mxu0 %v296
        %422 = vmatprep.subr.mxu0 0.0
        %423 = vmatpush1.msra.mxu0 %v293
        %424 = vmatprep.subr.mxu0 0.0
        %425 = vmatpush1.msra.mxu0 %v290
        %426 = vmatprep.subr.mxu0 0.0
        %427 = vmatpush1.msra.mxu0 %v287
        %428 = vmatprep.subr.mxu0 0.0
        %429 = vmatpush1.msra.mxu0 %v284
        %430 = vmatprep.subr.mxu0 0.0
        %431 = vmatpush1.msra.mxu0 %v281
        %432 = vmatprep.subr.mxu0 0.0
        %433 = vmatpush1.msra.mxu0 %v278
        %434 = vmatprep.subr.mxu0 0.0
        %435 = vmatpush1.msra.mxu0 %v275
        %436 = vmatprep.subr.mxu0 0.0
        %437 = vmatpush1.msra.mxu0 %v272
        %438 = vmatprep.subr.mxu0 0.0
        %439 = vmatpush2.msra.mxu0 0.0
        %440 = vmatprep.subr.mxu0 0.0
        %441 = vmatpush2.msra.mxu0 0.0
        %442 = vmatprep.subr.mxu0 0.0
        %443 = vmatpush2.msra.mxu0 0.0
        %444 = vmatprep.subr.mxu0 0.0
        %445 = vmatpush2.msra.mxu0 0.0
        %446 = vmatprep.subr.mxu0 0.0
        %447 = vmatpush2.msra.mxu0 0.0
        %448 = vmatprep.subr.mxu0 0.0
        %449 = vmatpush2.msra.mxu0 0.0
        %450 = vmatprep.subr.mxu0 0.0
        %451 = vmatpush2.msra.mxu0 0.0
        %452 = vmatprep.subr.mxu0 0.0
        %453 = vmatpush2.msra.mxu0 0.0
        %454 = vmatprep.subr.mxu0 0.0
        %455 = vmatpush2.msra.mxu0 0.0
        %456 = vmatprep.subr.mxu0 0.0
        %457 = vmatpush2.msra.mxu0 0.0
        %458 = vmatprep.subr.mxu0 0.0
        %459 = vmatpush2.msra.mxu0 0.0
        %460 = vmatprep.subr.mxu0 0.0
        %461 = vmatpush2.msra.mxu0 0.0
        %462 = vmatprep.subr.mxu0 0.0
        %463 = vmatpush2.msra.mxu0 0.0
        %464 = vmatprep.subr.mxu0 0.0
        %465 = vmatpush2.msra.mxu0 0.0
        %466 = vmatprep.subr.mxu0 0.0
        %467 = vmatpush2.msra.mxu0 0.0
        %468 = vmatprep.subr.mxu0 0.0
        %469 = vmatpush2.msra.mxu0 0.0
        %470 = vmatprep.mubr.f32.mxu0 0.0
        %471 = vmatmul.mubr.f32.gmra.mxu0 %v269
        %v472 = vpop.f32.mrf.mxu0
        %v473 = vadd.f32 %v331, %v472
        %v474 = vpop.f32.mrf.mxu0
        %475 = vdwg.mxu0
        %v476 = vld [vmem:[#allocation7] sm:$0xff]
        %v477 = vld [vmem:[#allocation7 + $0x8] sm:$0xff]
        %v478 = vld [vmem:[#allocation7 + $0x10] sm:$0xff]
        %v479 = vld [vmem:[#allocation7 + $0x18] sm:$0xff]
        %v480 = vld [vmem:[#allocation7 + $0x20] sm:$0xff]
        %v481 = vld [vmem:[#allocation7 + $0x28] sm:$0xff]
        %v482 = vld [vmem:[#allocation7 + $0x30] sm:$0xff]
        %v483 = vld [vmem:[#allocation7 + $0x38] sm:$0xff]
        %v484 = vld [vmem:[#allocation7 + $0x40] sm:$0xff]
        %v485 = vld [vmem:[#allocation7 + $0x48] sm:$0xff]
        %v486 = vld [vmem:[#allocation7 + $0x50] sm:$0xff]
        %v487 = vld [vmem:[#allocation7 + $0x58] sm:$0xff]
        %v488 = vld [vmem:[#allocation7 + $0x60] sm:$0xff]
        %v489 = vld [vmem:[#allocation7 + $0x68] sm:$0xff]
        %v490 = vld [vmem:[#allocation7 + $0x70] sm:$0xff]
        %v491 = vld [vmem:[#allocation7 + $0x78] sm:$0xff]
        %v492 = vld [vmem:[%s4] sm:$0x1]
        %vm493 = vcmask 261120
        %v495 = vsel %vm493, %v402, 0
        %v498 = vsel %vm493, %v404, 0
        %500 = vmatprep.subr.mxu0 0.0
        %501 = vmatpush1.xpose.msra.mxu0 0.0
        %502 = vmatprep.subr.mxu0 0.0
        %503 = vmatpush1.xpose.msra.mxu0 0.0
        %504 = vmatprep.subr.mxu0 0.0
        %505 = vmatpush1.xpose.msra.mxu0 0.0
        %506 = vmatprep.subr.mxu0 0.0
        %507 = vmatpush1.xpose.msra.mxu0 0.0
        %508 = vmatprep.subr.mxu0 0.0
        %509 = vmatpush1.xpose.msra.mxu0 0.0
        %510 = vmatprep.subr.mxu0 0.0
        %511 = vmatpush1.xpose.msra.mxu0 0.0
        %512 = vmatprep.subr.mxu0 0.0
        %513 = vmatpush1.xpose.msra.mxu0 0.0
        %514 = vmatprep.subr.mxu0 0.0
        %515 = vmatpush1.xpose.msra.mxu0 0.0
        %516 = vmatprep.subr.mxu0 0.0
        %517 = vmatpush1.xpose.msra.mxu0 0.0
        %518 = vmatprep.subr.mxu0 0.0
        %519 = vmatpush1.xpose.msra.mxu0 0.0
        %520 = vmatprep.subr.mxu0 0.0
        %521 = vmatpush1.xpose.msra.mxu0 0.0
        %522 = vmatprep.subr.mxu0 0.0
        %523 = vmatpush1.xpose.msra.mxu0 0.0
        %524 = vmatprep.subr.mxu0 0.0
        %525 = vmatpush1.xpose.msra.mxu0 0.0
        %526 = vmatprep.subr.mxu0 0.0
        %527 = vmatpush1.xpose.msra.mxu0 0.0
        %528 = vmatprep.subr.mxu0 0.0
        %529 = vmatpush1.xpose.msra.mxu0 0.0
        %530 = vmatprep.subr.mxu0 0.0
        %531 = vmatpush1.xpose.msra.mxu0 %v498
        %532 = vmatprep.subr.mxu0 0.0
        %533 = vmatpush2.xpose.msra.mxu0 0.0
        %534 = vmatprep.subr.mxu0 0.0
        %535 = vmatpush2.xpose.msra.mxu0 0.0
        %536 = vmatprep.subr.mxu0 0.0
        %537 = vmatpush2.xpose.msra.mxu0 0.0
        %538 = vmatprep.subr.mxu0 0.0
        %539 = vmatpush2.xpose.msra.mxu0 0.0
        %540 = vmatprep.subr.mxu0 0.0
        %541 = vmatpush2.xpose.msra.mxu0 0.0
        %542 = vmatprep.subr.mxu0 0.0
        %543 = vmatpush2.xpose.msra.mxu0 0.0
        %544 = vmatprep.subr.mxu0 0.0
        %545 = vmatpush2.xpose.msra.mxu0 0.0
        %546 = vmatprep.subr.mxu0 0.0
        %547 = vmatpush2.xpose.msra.mxu0 0.0
        %548 = vmatprep.subr.mxu0 0.0
        %549 = vmatpush2.xpose.msra.mxu0 0.0
        %550 = vmatprep.subr.mxu0 0.0
        %551 = vmatpush2.xpose.msra.mxu0 0.0
        %552 = vmatprep.subr.mxu0 0.0
        %553 = vmatpush2.xpose.msra.mxu0 0.0
        %554 = vmatprep.subr.mxu0 0.0
        %555 = vmatpush2.xpose.msra.mxu0 0.0
        %556 = vmatprep.subr.mxu0 0.0
        %557 = vmatpush2.xpose.msra.mxu0 0.0
        %558 = vmatprep.subr.mxu0 0.0
        %559 = vmatpush2.xpose.msra.mxu0 0.0
        %560 = vmatprep.subr.mxu0 0.0
        %561 = vmatpush2.xpose.msra.mxu0 0.0
        %562 = vmatprep.subr.mxu0 0.0
        %563 = vmatpush2.xpose.msra.mxu0 0.0
        %564 = vmatprep.mubr.f32.mxu0 0.0
        %565 = vmatmul.mubr.f32.gmra.mxu0 %v495
        %v566 = vpop.f32.mrf.mxu0
        %v567 = vadd.f32 0.0, %v566
        %v568 = vpop.f32.mrf.mxu0
        %569 = vdwg.mxu0
        %vm570 = vcmask 64512
        %v571 = vsel %vm570, %v567, -inf
        %572 = vmax.xlane.f32.xlu0 %v571
        %v573 = vpop.xlane.xlu0 %572
        %v574 = vsub.f32 %v567, %v573
        %v575 = vmul.f32 %v574, 1.442695
        %v576 = vpow.pop %v575
        %v577 = vsel %vm570, %v576, 0.0
        %578 = vadd.xlane.f32.xlu0 %v577
        %v579 = vpop.xlane.xlu0 %578
        %v581 = vsel %vm570, %v576, 0
        %583 = vmatprep.subr.mxu0 0.0
        %584 = vmatpush1.msra.mxu0 0.0
        %585 = vmatprep.subr.mxu0 0.0
        %586 = vmatpush1.msra.mxu0 0.0
        %587 = vmatprep.subr.mxu0 0.0
        %588 = vmatpush1.msra.mxu0 0.0
        %589 = vmatprep.subr.mxu0 0.0
        %590 = vmatpush1.msra.mxu0 0.0
        %591 = vmatprep.subr.mxu0 0.0
        %592 = vmatpush1.msra.mxu0 0.0
        %593 = vmatprep.subr.mxu0 0.0
        %594 = vmatpush1.msra.mxu0 0.0
        %595 = vmatprep.subr.mxu0 0.0
        %596 = vmatpush1.msra.mxu0 0.0
        %597 = vmatprep.subr.mxu0 0.0
        %598 = vmatpush1.msra.mxu0 0.0
        %599 = vmatprep.subr.mxu0 0.0
        %600 = vmatpush1.msra.mxu0 0.0
        %601 = vmatprep.subr.mxu0 0.0
        %602 = vmatpush1.msra.mxu0 0.0
        %603 = vmatprep.subr.mxu0 0.0
        %604 = vmatpush1.msra.mxu0 0.0
        %605 = vmatprep.subr.mxu0 0.0
        %606 = vmatpush1.msra.mxu0 0.0
        %607 = vmatprep.subr.mxu0 0.0
        %608 = vmatpush1.msra.mxu0 0.0
        %609 = vmatprep.subr.mxu0 0.0
        %610 = vmatpush1.msra.mxu0 0.0
        %611 = vmatprep.subr.mxu0 0.0
        %612 = vmatpush1.msra.mxu0 0.0
        %613 = vmatprep.subr.mxu0 0.0
        %614 = vmatpush1.msra.mxu0 %v473
        %615 = vmatprep.subr.mxu0 0.0
        %616 = vmatpush2.msra.mxu0 0.0
        %617 = vmatprep.subr.mxu0 0.0
        %618 = vmatpush2.msra.mxu0 0.0
        %619 = vmatprep.subr.mxu0 0.0
        %620 = vmatpush2.msra.mxu0 0.0
        %621 = vmatprep.subr.mxu0 0.0
        %622 = vmatpush2.msra.mxu0 0.0
        %623 = vmatprep.subr.mxu0 0.0
        %624 = vmatpush2.msra.mxu0 0.0
        %625 = vmatprep.subr.mxu0 0.0
        %626 = vmatpush2.msra.mxu0 0.0
        %627 = vmatprep.subr.mxu0 0.0
        %628 = vmatpush2.msra.mxu0 0.0
        %629 = vmatprep.subr.mxu0 0.0
        %630 = vmatpush2.msra.mxu0 0.0
        %631 = vmatprep.subr.mxu0 0.0
        %632 = vmatpush2.msra.mxu0 0.0
        %633 = vmatprep.subr.mxu0 0.0
        %634 = vmatpush2.msra.mxu0 0.0
        %635 = vmatprep.subr.mxu0 0.0
        %636 = vmatpush2.msra.mxu0 0.0
        %637 = vmatprep.subr.mxu0 0.0
        %638 = vmatpush2.msra.mxu0 0.0
        %639 = vmatprep.subr.mxu0 0.0
        %640 = vmatpush2.msra.mxu0 0.0
        %641 = vmatprep.subr.mxu0 0.0
        %642 = vmatpush2.msra.mxu0 0.0
        %643 = vmatprep.subr.mxu0 0.0
        %644 = vmatpush2.msra.mxu0 0.0
        %645 = vmatprep.subr.mxu0 0.0
        %646 = vmatpush2.msra.mxu0 0.0
        %647 = vmatprep.mubr.f32.mxu0 0.0
        %648 = vmatmul.mubr.f32.gmra.mxu0 %v581
        %v649 = vpop.f32.mrf.mxu0
        %v650 = vadd.f32 0.0, %v649
        %v651 = vpop.f32.mrf.mxu0
        %652 = vdwg.mxu0
        %v653 = vrcp.pop %v579
        %v654 = vmul.f32 %v650, %v653
        %655 = vrot.lane.b32.xlu0 %v402, 96
        %v656 = vpop.permute.xlu0 %655
        %657 = vrot.lane.b32.xlu0 %v404, 96
        %v658 = vpop.permute.xlu0 %657
        %v659 = vsel %vm493, %v656, 0
        %v661 = vsel %vm493, %v658, 0
        %663 = vmatprep.subr.mxu0 0.0
        %664 = vmatpush1.xpose.msra.mxu0 0.0
        %665 = vmatprep.subr.mxu0 0.0
        %666 = vmatpush1.xpose.msra.mxu0 0.0
        %667 = vmatprep.subr.mxu0 0.0
        %668 = vmatpush1.xpose.msra.mxu0 0.0
        %669 = vmatprep.subr.mxu0 0.0
        %670 = vmatpush1.xpose.msra.mxu0 0.0
        %671 = vmatprep.subr.mxu0 0.0
        %672 = vmatpush1.xpose.msra.mxu0 0.0
        %673 = vmatprep.subr.mxu0 0.0
        %674 = vmatpush1.xpose.msra.mxu0 0.0
        %675 = vmatprep.subr.mxu0 0.0
        %676 = vmatpush1.xpose.msra.mxu0 0.0
        %677 = vmatprep.subr.mxu0 0.0
        %678 = vmatpush1.xpose.msra.mxu0 0.0
        %679 = vmatprep.subr.mxu0 0.0
        %680 = vmatpush1.xpose.msra.mxu0 0.0
        %681 = vmatprep.subr.mxu0 0.0
        %682 = vmatpush1.xpose.msra.mxu0 0.0
        %683 = vmatprep.subr.mxu0 0.0
        %684 = vmatpush1.xpose.msra.mxu0 0.0
        %685 = vmatprep.subr.mxu0 0.0
        %686 = vmatpush1.xpose.msra.mxu0 0.0
        %687 = vmatprep.subr.mxu0 0.0
        %688 = vmatpush1.xpose.msra.mxu0 0.0
        %689 = vmatprep.subr.mxu0 0.0
        %690 = vmatpush1.xpose.msra.mxu0 0.0
        %691 = vmatprep.subr.mxu0 0.0
        %692 = vmatpush1.xpose.msra.mxu0 0.0
        %693 = vmatprep.subr.mxu0 0.0
        %694 = vmatpush1.xpose.msra.mxu0 %v661
        %695 = vmatprep.subr.mxu0 0.0
        %696 = vmatpush2.xpose.msra.mxu0 0.0
        %697 = vmatprep.subr.mxu0 0.0
        %698 = vmatpush2.xpose.msra.mxu0 0.0
        %699 = vmatprep.subr.mxu0 0.0
        %700 = vmatpush2.xpose.msra.mxu0 0.0
        %701 = vmatprep.subr.mxu0 0.0
        %702 = vmatpush2.xpose.msra.mxu0 0.0
        %703 = vmatprep.subr.mxu0 0.0
        %704 = vmatpush2.xpose.msra.mxu0 0.0
        %705 = vmatprep.subr.mxu0 0.0
        %706 = vmatpush2.xpose.msra.mxu0 0.0
        %707 = vmatprep.subr.mxu0 0.0
        %708 = vmatpush2.xpose.msra.mxu0 0.0
        %709 = vmatprep.subr.mxu0 0.0
        %710 = vmatpush2.xpose.msra.mxu0 0.0
        %711 = vmatprep.subr.mxu0 0.0
        %712 = vmatpush2.xpose.msra.mxu0 0.0
        %713 = vmatprep.subr.mxu0 0.0
        %714 = vmatpush2.xpose.msra.mxu0 0.0
        %715 = vmatprep.subr.mxu0 0.0
        %716 = vmatpush2.xpose.msra.mxu0 0.0
        %717 = vmatprep.subr.mxu0 0.0
        %718 = vmatpush2.xpose.msra.mxu0 0.0
        %719 = vmatprep.subr.mxu0 0.0
        %720 = vmatpush2.xpose.msra.mxu0 0.0
        %721 = vmatprep.subr.mxu0 0.0
        %722 = vmatpush2.xpose.msra.mxu0 0.0
        %723 = vmatprep.subr.mxu0 0.0
        %724 = vmatpush2.xpose.msra.mxu0 0.0
        %725 = vmatprep.subr.mxu0 0.0
        %726 = vmatpush2.xpose.msra.mxu0 0.0
        %727 = vmatprep.mubr.f32.mxu0 0.0
        %728 = vmatmul.mubr.f32.gmra.mxu0 %v659
        %v729 = vpop.f32.mrf.mxu0
        %v730 = vadd.f32 0.0, %v729
        %v731 = vpop.f32.mrf.mxu0
        %732 = vdwg.mxu0
        %v733 = vsel %vm570, %v730, -inf
        %734 = vmax.xlane.f32.xlu0 %v733
        %v735 = vpop.xlane.xlu0 %734
        %v736 = vsub.f32 %v730, %v735
        %v737 = vmul.f32 %v736, 1.442695
        %v738 = vpow.pop %v737
        %v739 = vsel %vm570, %v738, 0.0
        %740 = vadd.xlane.f32.xlu0 %v739
        %v741 = vpop.xlane.xlu0 %740
        %743 = vrot.lane.b32.xlu0 %v473, 96
        %v744 = vpop.permute.xlu0 %743
        %v747 = vsel %vm570, %v738, 0
        %749 = vmatprep.subr.mxu0 0.0
        %750 = vmatpush1.msra.mxu0 0.0
        %751 = vmatprep.subr.mxu0 0.0
        %752 = vmatpush1.msra.mxu0 0.0
        %753 = vmatprep.subr.mxu0 0.0
        %754 = vmatpush1.msra.mxu0 0.0
        %755 = vmatprep.subr.mxu0 0.0
        %756 = vmatpush1.msra.mxu0 0.0
        %757 = vmatprep.subr.mxu0 0.0
        %758 = vmatpush1.msra.mxu0 0.0
        %759 = vmatprep.subr.mxu0 0.0
        %760 = vmatpush1.msra.mxu0 0.0
        %761 = vmatprep.subr.mxu0 0.0
        %762 = vmatpush1.msra.mxu0 0.0
        %763 = vmatprep.subr.mxu0 0.0
        %764 = vmatpush1.msra.mxu0 0.0
        %765 = vmatprep.subr.mxu0 0.0
        %766 = vmatpush1.msra.mxu0 0.0
        %767 = vmatprep.subr.mxu0 0.0
        %768 = vmatpush1.msra.mxu0 0.0
        %769 = vmatprep.subr.mxu0 0.0
        %770 = vmatpush1.msra.mxu0 0.0
        %771 = vmatprep.subr.mxu0 0.0
        %772 = vmatpush1.msra.mxu0 0.0
        %773 = vmatprep.subr.mxu0 0.0
        %774 = vmatpush1.msra.mxu0 0.0
        %775 = vmatprep.subr.mxu0 0.0
        %776 = vmatpush1.msra.mxu0 0.0
        %777 = vmatprep.subr.mxu0 0.0
        %778 = vmatpush1.msra.mxu0 0.0
        %779 = vmatprep.subr.mxu0 0.0
        %780 = vmatpush1.msra.mxu0 %v744
        %781 = vmatprep.subr.mxu0 0.0
        %782 = vmatpush2.msra.mxu0 0.0
        %783 = vmatprep.subr.mxu0 0.0
        %784 = vmatpush2.msra.mxu0 0.0
        %785 = vmatprep.subr.mxu0 0.0
        %786 = vmatpush2.msra.mxu0 0.0
        %787 = vmatprep.subr.mxu0 0.0
        %788 = vmatpush2.msra.mxu0 0.0
        %789 = vmatprep.subr.mxu0 0.0
        %790 = vmatpush2.msra.mxu0 0.0
        %791 = vmatprep.subr.mxu0 0.0
        %792 = vmatpush2.msra.mxu0 0.0
        %793 = vmatprep.subr.mxu0 0.0
        %794 = vmatpush2.msra.mxu0 0.0
        %795 = vmatprep.subr.mxu0 0.0
        %796 = vmatpush2.msra.mxu0 0.0
        %797 = vmatprep.subr.mxu0 0.0
        %798 = vmatpush2.msra.mxu0 0.0
        %799 = vmatprep.subr.mxu0 0.0
        %800 = vmatpush2.msra.mxu0 0.0
        %801 = vmatprep.subr.mxu0 0.0
        %802 = vmatpush2.msra.mxu0 0.0
        %803 = vmatprep.subr.mxu0 0.0
        %804 = vmatpush2.msra.mxu0 0.0
        %805 = vmatprep.subr.mxu0 0.0
        %806 = vmatpush2.msra.mxu0 0.0
        %807 = vmatprep.subr.mxu0 0.0
        %808 = vmatpush2.msra.mxu0 0.0
        %809 = vmatprep.subr.mxu0 0.0
        %810 = vmatpush2.msra.mxu0 0.0
        %811 = vmatprep.subr.mxu0 0.0
        %812 = vmatpush2.msra.mxu0 0.0
        %813 = vmatprep.mubr.f32.mxu0 0.0
        %814 = vmatmul.mubr.f32.gmra.mxu0 %v747
        %v815 = vpop.f32.mrf.mxu0
        %v816 = vadd.f32 0.0, %v815
        %v817 = vpop.f32.mrf.mxu0
        %818 = vdwg.mxu0
        %v819 = vrcp.pop %v741
        %v820 = vmul.f32 %v816, %v819
        %v822 = vsel %vm493, %v820, 0
        %824 = vmatprep.subr.mxu0 0.0
        %825 = vmatpush1.msra.mxu0 0.0
        %826 = vmatprep.subr.mxu0 0.0
        %827 = vmatpush1.msra.mxu0 0.0
        %828 = vmatprep.subr.mxu0 0.0
        %829 = vmatpush1.msra.mxu0 0.0
        %830 = vmatprep.subr.mxu0 0.0
        %831 = vmatpush1.msra.mxu0 0.0
        %832 = vmatprep.subr.mxu0 0.0
        %833 = vmatpush1.msra.mxu0 0.0
        %834 = vmatprep.subr.mxu0 0.0
        %835 = vmatpush1.msra.mxu0 0.0
        %836 = vmatprep.subr.mxu0 0.0
        %837 = vmatpush1.msra.mxu0 0.0
        %838 = vmatprep.subr.mxu0 0.0
        %839 = vmatpush1.msra.mxu0 0.0
        %840 = vmatprep.subr.mxu0 0.0
        %841 = vmatpush1.msra.mxu0 0.0
        %842 = vmatprep.subr.mxu0 0.0
        %843 = vmatpush1.msra.mxu0 0.0
        %844 = vmatprep.subr.mxu0 0.0
        %845 = vmatpush1.msra.mxu0 0.0
        %846 = vmatprep.subr.mxu0 0.0
        %847 = vmatpush1.msra.mxu0 0.0
        %848 = vmatprep.subr.mxu0 0.0
        %849 = vmatpush1.msra.mxu0 %v483
        %850 = vmatprep.subr.mxu0 0.0
        %851 = vmatpush1.msra.mxu0 %v482
        %852 = vmatprep.subr.mxu0 0.0
        %853 = vmatpush1.msra.mxu0 %v481
        %854 = vmatprep.subr.mxu0 0.0
        %855 = vmatpush1.msra.mxu0 %v480
        %856 = vmatprep.subr.mxu0 0.0
        %857 = vmatpush2.msra.mxu0 0.0
        %858 = vmatprep.subr.mxu0 0.0
        %859 = vmatpush2.msra.mxu0 0.0
        %860 = vmatprep.subr.mxu0 0.0
        %861 = vmatpush2.msra.mxu0 0.0
        %862 = vmatprep.subr.mxu0 0.0
        %863 = vmatpush2.msra.mxu0 0.0
        %864 = vmatprep.subr.mxu0 0.0
        %865 = vmatpush2.msra.mxu0 0.0
        %866 = vmatprep.subr.mxu0 0.0
        %867 = vmatpush2.msra.mxu0 0.0
        %868 = vmatprep.subr.mxu0 0.0
        %869 = vmatpush2.msra.mxu0 0.0
        %870 = vmatprep.subr.mxu0 0.0
        %871 = vmatpush2.msra.mxu0 0.0
        %872 = vmatprep.subr.mxu0 0.0
        %873 = vmatpush2.msra.mxu0 0.0
        %874 = vmatprep.subr.mxu0 0.0
        %875 = vmatpush2.msra.mxu0 0.0
        %876 = vmatprep.subr.mxu0 0.0
        %877 = vmatpush2.msra.mxu0 0.0
        %878 = vmatprep.subr.mxu0 0.0
        %879 = vmatpush2.msra.mxu0 0.0
        %880 = vmatprep.subr.mxu0 0.0
        %881 = vmatpush2.msra.mxu0 0.0
        %882 = vmatprep.subr.mxu0 0.0
        %883 = vmatpush2.msra.mxu0 0.0
        %884 = vmatprep.subr.mxu0 0.0
        %885 = vmatpush2.msra.mxu0 0.0
        %886 = vmatprep.subr.mxu0 0.0
        %887 = vmatpush2.msra.mxu0 0.0
        %888 = vmatprep.mubr.f32.mxu0 0.0
        %889 = vmatmul.mubr.f32.gmra.mxu0 %v822
        %v890 = vpop.f32.mrf.mxu0
        %v891 = vadd.f32 0.0, %v890
        %v892 = vpop.f32.mrf.mxu0
        %893 = vdwg.mxu0
        %v895 = vsel %vm493, %v654, 0
        %897 = vmatprep.subr.mxu0 0.0
        %898 = vmatpush1.msra.mxu0 0.0
        %899 = vmatprep.subr.mxu0 0.0
        %900 = vmatpush1.msra.mxu0 0.0
        %901 = vmatprep.subr.mxu0 0.0
        %902 = vmatpush1.msra.mxu0 0.0
        %903 = vmatprep.subr.mxu0 0.0
        %904 = vmatpush1.msra.mxu0 0.0
        %905 = vmatprep.subr.mxu0 0.0
        %906 = vmatpush1.msra.mxu0 0.0
        %907 = vmatprep.subr.mxu0 0.0
        %908 = vmatpush1.msra.mxu0 0.0
        %909 = vmatprep.subr.mxu0 0.0
        %910 = vmatpush1.msra.mxu0 0.0
        %911 = vmatprep.subr.mxu0 0.0
        %912 = vmatpush1.msra.mxu0 0.0
        %913 = vmatprep.subr.mxu0 0.0
        %914 = vmatpush1.msra.mxu0 0.0
        %915 = vmatprep.subr.mxu0 0.0
        %916 = vmatpush1.msra.mxu0 0.0
        %917 = vmatprep.subr.mxu0 0.0
        %918 = vmatpush1.msra.mxu0 0.0
        %919 = vmatprep.subr.mxu0 0.0
        %920 = vmatpush1.msra.mxu0 0.0
        %921 = vmatprep.subr.mxu0 0.0
        %922 = vmatpush1.msra.mxu0 %v479
        %923 = vmatprep.subr.mxu0 0.0
        %924 = vmatpush1.msra.mxu0 %v478
        %925 = vmatprep.subr.mxu0 0.0
        %926 = vmatpush1.msra.mxu0 %v477
        %927 = vmatprep.subr.mxu0 0.0
        %928 = vmatpush1.msra.mxu0 %v476
        %929 = vmatprep.subr.mxu0 0.0
        %930 = vmatpush2.msra.mxu0 0.0
        %931 = vmatprep.subr.mxu0 0.0
        %932 = vmatpush2.msra.mxu0 0.0
        %933 = vmatprep.subr.mxu0 0.0
        %934 = vmatpush2.msra.mxu0 0.0
        %935 = vmatprep.subr.mxu0 0.0
        %936 = vmatpush2.msra.mxu0 0.0
        %937 = vmatprep.subr.mxu0 0.0
        %938 = vmatpush2.msra.mxu0 0.0
        %939 = vmatprep.subr.mxu0 0.0
        %940 = vmatpush2.msra.mxu0 0.0
        %941 = vmatprep.subr.mxu0 0.0
        %942 = vmatpush2.msra.mxu0 0.0
        %943 = vmatprep.subr.mxu0 0.0
        %944 = vmatpush2.msra.mxu0 0.0
        %945 = vmatprep.subr.mxu0 0.0
        %946 = vmatpush2.msra.mxu0 0.0
        %947 = vmatprep.subr.mxu0 0.0
        %948 = vmatpush2.msra.mxu0 0.0
        %949 = vmatprep.subr.mxu0 0.0
        %950 = vmatpush2.msra.mxu0 0.0
        %951 = vmatprep.subr.mxu0 0.0
        %952 = vmatpush2.msra.mxu0 0.0
        %953 = vmatprep.subr.mxu0 0.0
        %954 = vmatpush2.msra.mxu0 0.0
        %955 = vmatprep.subr.mxu0 0.0
        %956 = vmatpush2.msra.mxu0 0.0
        %957 = vmatprep.subr.mxu0 0.0
        %958 = vmatpush2.msra.mxu0 0.0
        %959 = vmatprep.subr.mxu0 0.0
        %960 = vmatpush2.msra.mxu0 0.0
        %961 = vmatprep.mubr.f32.mxu0 0.0
        %962 = vmatmul.mubr.f32.gmra.mxu0 %v895
        %v963 = vpop.f32.mrf.mxu0
        %v964 = vadd.f32 %v891, %v963
        %v965 = vpop.f32.mrf.mxu0
        %966 = vdwg.mxu0
        %967 = vrot.lane.b32.xlu0 %v402, 64
        %v968 = vpop.permute.xlu0 %967
        %969 = vrot.lane.b32.xlu0 %v404, 64
        %v970 = vpop.permute.xlu0 %969
        %v971 = vsel %vm493, %v968, 0
        %v973 = vsel %vm493, %v970, 0
        %975 = vmatprep.subr.mxu0 0.0
        %976 = vmatpush1.xpose.msra.mxu0 0.0
        %977 = vmatprep.subr.mxu0 0.0
        %978 = vmatpush1.xpose.msra.mxu0 0.0
        %979 = vmatprep.subr.mxu0 0.0
        %980 = vmatpush1.xpose.msra.mxu0 0.0
        %981 = vmatprep.subr.mxu0 0.0
        %982 = vmatpush1.xpose.msra.mxu0 0.0
        %983 = vmatprep.subr.mxu0 0.0
        %984 = vmatpush1.xpose.msra.mxu0 0.0
        %985 = vmatprep.subr.mxu0 0.0
        %986 = vmatpush1.xpose.msra.mxu0 0.0
        %987 = vmatprep.subr.mxu0 0.0
        %988 = vmatpush1.xpose.msra.mxu0 0.0
        %989 = vmatprep.subr.mxu0 0.0
        %990 = vmatpush1.xpose.msra.mxu0 0.0
        %991 = vmatprep.subr.mxu0 0.0
        %992 = vmatpush1.xpose.msra.mxu0 0.0
        %993 = vmatprep.subr.mxu0 0.0
        %994 = vmatpush1.xpose.msra.mxu0 0.0
        %995 = vmatprep.subr.mxu0 0.0
        %996 = vmatpush1.xpose.msra.mxu0 0.0
        %997 = vmatprep.subr.mxu0 0.0
        %998 = vmatpush1.xpose.msra.mxu0 0.0
        %999 = vmatprep.subr.mxu0 0.0
        %1000 = vmatpush1.xpose.msra.mxu0 0.0
        %1001 = vmatprep.subr.mxu0 0.0
        %1002 = vmatpush1.xpose.msra.mxu0 0.0
        %1003 = vmatprep.subr.mxu0 0.0
        %1004 = vmatpush1.xpose.msra.mxu0 0.0
        %1005 = vmatprep.subr.mxu0 0.0
        %1006 = vmatpush1.xpose.msra.mxu0 %v973
        %1007 = vmatprep.subr.mxu0 0.0
        %1008 = vmatpush2.xpose.msra.mxu0 0.0
        %1009 = vmatprep.subr.mxu0 0.0
        %1010 = vmatpush2.xpose.msra.mxu0 0.0
        %1011 = vmatprep.subr.mxu0 0.0
        %1012 = vmatpush2.xpose.msra.mxu0 0.0
        %1013 = vmatprep.subr.mxu0 0.0
        %1014 = vmatpush2.xpose.msra.mxu0 0.0
        %1015 = vmatprep.subr.mxu0 0.0
        %1016 = vmatpush2.xpose.msra.mxu0 0.0
        %1017 = vmatprep.subr.mxu0 0.0
        %1018 = vmatpush2.xpose.msra.mxu0 0.0
        %1019 = vmatprep.subr.mxu0 0.0
        %1020 = vmatpush2.xpose.msra.mxu0 0.0
        %1021 = vmatprep.subr.mxu0 0.0
        %1022 = vmatpush2.xpose.msra.mxu0 0.0
        %1023 = vmatprep.subr.mxu0 0.0
        %1024 = vmatpush2.xpose.msra.mxu0 0.0
        %1025 = vmatprep.subr.mxu0 0.0
        %1026 = vmatpush2.xpose.msra.mxu0 0.0
        %1027 = vmatprep.subr.mxu0 0.0
        %1028 = vmatpush2.xpose.msra.mxu0 0.0
        %1029 = vmatprep.subr.mxu0 0.0
        %1030 = vmatpush2.xpose.msra.mxu0 0.0
        %1031 = vmatprep.subr.mxu0 0.0
        %1032 = vmatpush2.xpose.msra.mxu0 0.0
        %1033 = vmatprep.subr.mxu0 0.0
        %1034 = vmatpush2.xpose.msra.mxu0 0.0
        %1035 = vmatprep.subr.mxu0 0.0
        %1036 = vmatpush2.xpose.msra.mxu0 0.0
        %1037 = vmatprep.subr.mxu0 0.0
        %1038 = vmatpush2.xpose.msra.mxu0 0.0
        %1039 = vmatprep.mubr.f32.mxu0 0.0
        %1040 = vmatmul.mubr.f32.gmra.mxu0 %v971
        %v1041 = vpop.f32.mrf.mxu0
        %v1042 = vadd.f32 0.0, %v1041
        %v1043 = vpop.f32.mrf.mxu0
        %1044 = vdwg.mxu0
        %v1045 = vsel %vm570, %v1042, -inf
        %1046 = vmax.xlane.f32.xlu0 %v1045
        %v1047 = vpop.xlane.xlu0 %1046
        %v1048 = vsub.f32 %v1042, %v1047
        %v1049 = vmul.f32 %v1048, 1.442695
        %v1050 = vpow.pop %v1049
        %v1051 = vsel %vm570, %v1050, 0.0
        %1052 = vadd.xlane.f32.xlu0 %v1051
        %v1053 = vpop.xlane.xlu0 %1052
        %1054 = vrot.lane.b32.xlu0 %v473, 64
        %v1055 = vpop.permute.xlu0 %1054
        %v1058 = vsel %vm570, %v1050, 0
        %1060 = vmatprep.subr.mxu0 0.0
        %1061 = vmatpush1.msra.mxu0 0.0
        %1062 = vmatprep.subr.mxu0 0.0
        %1063 = vmatpush1.msra.mxu0 0.0
        %1064 = vmatprep.subr.mxu0 0.0
        %1065 = vmatpush1.msra.mxu0 0.0
        %1066 = vmatprep.subr.mxu0 0.0
        %1067 = vmatpush1.msra.mxu0 0.0
        %1068 = vmatprep.subr.mxu0 0.0
        %1069 = vmatpush1.msra.mxu0 0.0
        %1070 = vmatprep.subr.mxu0 0.0
        %1071 = vmatpush1.msra.mxu0 0.0
        %1072 = vmatprep.subr.mxu0 0.0
        %1073 = vmatpush1.msra.mxu0 0.0
        %1074 = vmatprep.subr.mxu0 0.0
        %1075 = vmatpush1.msra.mxu0 0.0
        %1076 = vmatprep.subr.mxu0 0.0
        %1077 = vmatpush1.msra.mxu0 0.0
        %1078 = vmatprep.subr.mxu0 0.0
        %1079 = vmatpush1.msra.mxu0 0.0
        %1080 = vmatprep.subr.mxu0 0.0
        %1081 = vmatpush1.msra.mxu0 0.0
        %1082 = vmatprep.subr.mxu0 0.0
        %1083 = vmatpush1.msra.mxu0 0.0
        %1084 = vmatprep.subr.mxu0 0.0
        %1085 = vmatpush1.msra.mxu0 0.0
        %1086 = vmatprep.subr.mxu0 0.0
        %1087 = vmatpush1.msra.mxu0 0.0
        %1088 = vmatprep.subr.mxu0 0.0
        %1089 = vmatpush1.msra.mxu0 0.0
        %1090 = vmatprep.subr.mxu0 0.0
        %1091 = vmatpush1.msra.mxu0 %v1055
        %1092 = vmatprep.subr.mxu0 0.0
        %1093 = vmatpush2.msra.mxu0 0.0
        %1094 = vmatprep.subr.mxu0 0.0
        %1095 = vmatpush2.msra.mxu0 0.0
        %1096 = vmatprep.subr.mxu0 0.0
        %1097 = vmatpush2.msra.mxu0 0.0
        %1098 = vmatprep.subr.mxu0 0.0
        %1099 = vmatpush2.msra.mxu0 0.0
        %1100 = vmatprep.subr.mxu0 0.0
        %1101 = vmatpush2.msra.mxu0 0.0
        %1102 = vmatprep.subr.mxu0 0.0
        %1103 = vmatpush2.msra.mxu0 0.0
        %1104 = vmatprep.subr.mxu0 0.0
        %1105 = vmatpush2.msra.mxu0 0.0
        %1106 = vmatprep.subr.mxu0 0.0
        %1107 = vmatpush2.msra.mxu0 0.0
        %1108 = vmatprep.subr.mxu0 0.0
        %1109 = vmatpush2.msra.mxu0 0.0
        %1110 = vmatprep.subr.mxu0 0.0
        %1111 = vmatpush2.msra.mxu0 0.0
        %1112 = vmatprep.subr.mxu0 0.0
        %1113 = vmatpush2.msra.mxu0 0.0
        %1114 = vmatprep.subr.mxu0 0.0
        %1115 = vmatpush2.msra.mxu0 0.0
        %1116 = vmatprep.subr.mxu0 0.0
        %1117 = vmatpush2.msra.mxu0 0.0
        %1118 = vmatprep.subr.mxu0 0.0
        %1119 = vmatpush2.msra.mxu0 0.0
        %1120 = vmatprep.subr.mxu0 0.0
        %1121 = vmatpush2.msra.mxu0 0.0
        %1122 = vmatprep.subr.mxu0 0.0
        %1123 = vmatpush2.msra.mxu0 0.0
        %1124 = vmatprep.mubr.f32.mxu0 0.0
        %1125 = vmatmul.mubr.f32.gmra.mxu0 %v1058
        %v1126 = vpop.f32.mrf.mxu0
        %v1127 = vadd.f32 0.0, %v1126
        %v1128 = vpop.f32.mrf.mxu0
        %1129 = vdwg.mxu0
        %v1130 = vrcp.pop %v1053
        %v1131 = vmul.f32 %v1127, %v1130
        %v1133 = vsel %vm493, %v1131, 0
        %1135 = vmatprep.subr.mxu0 0.0
        %1136 = vmatpush1.msra.mxu0 0.0
        %1137 = vmatprep.subr.mxu0 0.0
        %1138 = vmatpush1.msra.mxu0 0.0
        %1139 = vmatprep.subr.mxu0 0.0
        %1140 = vmatpush1.msra.mxu0 0.0
        %1141 = vmatprep.subr.mxu0 0.0
        %1142 = vmatpush1.msra.mxu0 0.0
        %1143 = vmatprep.subr.mxu0 0.0
        %1144 = vmatpush1.msra.mxu0 0.0
        %1145 = vmatprep.subr.mxu0 0.0
        %1146 = vmatpush1.msra.mxu0 0.0
        %1147 = vmatprep.subr.mxu0 0.0
        %1148 = vmatpush1.msra.mxu0 0.0
        %1149 = vmatprep.subr.mxu0 0.0
        %1150 = vmatpush1.msra.mxu0 0.0
        %1151 = vmatprep.subr.mxu0 0.0
        %1152 = vmatpush1.msra.mxu0 0.0
        %1153 = vmatprep.subr.mxu0 0.0
        %1154 = vmatpush1.msra.mxu0 0.0
        %1155 = vmatprep.subr.mxu0 0.0
        %1156 = vmatpush1.msra.mxu0 0.0
        %1157 = vmatprep.subr.mxu0 0.0
        %1158 = vmatpush1.msra.mxu0 0.0
        %1159 = vmatprep.subr.mxu0 0.0
        %1160 = vmatpush1.msra.mxu0 %v487
        %1161 = vmatprep.subr.mxu0 0.0
        %1162 = vmatpush1.msra.mxu0 %v486
        %1163 = vmatprep.subr.mxu0 0.0
        %1164 = vmatpush1.msra.mxu0 %v485
        %1165 = vmatprep.subr.mxu0 0.0
        %1166 = vmatpush1.msra.mxu0 %v484
        %1167 = vmatprep.subr.mxu0 0.0
        %1168 = vmatpush2.msra.mxu0 0.0
        %1169 = vmatprep.subr.mxu0 0.0
        %1170 = vmatpush2.msra.mxu0 0.0
        %1171 = vmatprep.subr.mxu0 0.0
        %1172 = vmatpush2.msra.mxu0 0.0
        %1173 = vmatprep.subr.mxu0 0.0
        %1174 = vmatpush2.msra.mxu0 0.0
        %1175 = vmatprep.subr.mxu0 0.0
        %1176 = vmatpush2.msra.mxu0 0.0
        %1177 = vmatprep.subr.mxu0 0.0
        %1178 = vmatpush2.msra.mxu0 0.0
        %1179 = vmatprep.subr.mxu0 0.0
        %1180 = vmatpush2.msra.mxu0 0.0
        %1181 = vmatprep.subr.mxu0 0.0
        %1182 = vmatpush2.msra.mxu0 0.0
        %1183 = vmatprep.subr.mxu0 0.0
        %1184 = vmatpush2.msra.mxu0 0.0
        %1185 = vmatprep.subr.mxu0 0.0
        %1186 = vmatpush2.msra.mxu0 0.0
        %1187 = vmatprep.subr.mxu0 0.0
        %1188 = vmatpush2.msra.mxu0 0.0
        %1189 = vmatprep.subr.mxu0 0.0
        %1190 = vmatpush2.msra.mxu0 0.0
        %1191 = vmatprep.subr.mxu0 0.0
        %1192 = vmatpush2.msra.mxu0 0.0
        %1193 = vmatprep.subr.mxu0 0.0
        %1194 = vmatpush2.msra.mxu0 0.0
        %1195 = vmatprep.subr.mxu0 0.0
        %1196 = vmatpush2.msra.mxu0 0.0
        %1197 = vmatprep.subr.mxu0 0.0
        %1198 = vmatpush2.msra.mxu0 0.0
        %1199 = vmatprep.mubr.f32.mxu0 0.0
        %1200 = vmatmul.mubr.f32.gmra.mxu0 %v1133
        %v1201 = vpop.f32.mrf.mxu0
        %v1202 = vadd.f32 0.0, %v1201
        %v1203 = vpop.f32.mrf.mxu0
        %1204 = vdwg.mxu0
        %v1205 = vadd.f32 %v964, %v1202
        %1206 = vrot.lane.b32.xlu0 %v402, 32
        %v1207 = vpop.permute.xlu0 %1206
        %1208 = vrot.lane.b32.xlu0 %v404, 32
        %v1209 = vpop.permute.xlu0 %1208
        %v1210 = vsel %vm493, %v1207, 0
        %v1212 = vsel %vm493, %v1209, 0
        %1214 = vmatprep.subr.mxu0 0.0
        %1215 = vmatpush1.xpose.msra.mxu0 0.0
        %1216 = vmatprep.subr.mxu0 0.0
        %1217 = vmatpush1.xpose.msra.mxu0 0.0
        %1218 = vmatprep.subr.mxu0 0.0
        %1219 = vmatpush1.xpose.msra.mxu0 0.0
        %1220 = vmatprep.subr.mxu0 0.0
        %1221 = vmatpush1.xpose.msra.mxu0 0.0
        %1222 = vmatprep.subr.mxu0 0.0
        %1223 = vmatpush1.xpose.msra.mxu0 0.0
        %1224 = vmatprep.subr.mxu0 0.0
        %1225 = vmatpush1.xpose.msra.mxu0 0.0
        %1226 = vmatprep.subr.mxu0 0.0
        %1227 = vmatpush1.xpose.msra.mxu0 0.0
        %1228 = vmatprep.subr.mxu0 0.0
        %1229 = vmatpush1.xpose.msra.mxu0 0.0
        %1230 = vmatprep.subr.mxu0 0.0
        %1231 = vmatpush1.xpose.msra.mxu0 0.0
        %1232 = vmatprep.subr.mxu0 0.0
        %1233 = vmatpush1.xpose.msra.mxu0 0.0
        %1234 = vmatprep.subr.mxu0 0.0
        %1235 = vmatpush1.xpose.msra.mxu0 0.0
        %1236 = vmatprep.subr.mxu0 0.0
        %1237 = vmatpush1.xpose.msra.mxu0 0.0
        %1238 = vmatprep.subr.mxu0 0.0
        %1239 = vmatpush1.xpose.msra.mxu0 0.0
        %1240 = vmatprep.subr.mxu0 0.0
        %1241 = vmatpush1.xpose.msra.mxu0 0.0
        %1242 = vmatprep.subr.mxu0 0.0
        %1243 = vmatpush1.xpose.msra.mxu0 0.0
        %1244 = vmatprep.subr.mxu0 0.0
        %1245 = vmatpush1.xpose.msra.mxu0 %v1212
        %1246 = vmatprep.subr.mxu0 0.0
        %1247 = vmatpush2.xpose.msra.mxu0 0.0
        %1248 = vmatprep.subr.mxu0 0.0
        %1249 = vmatpush2.xpose.msra.mxu0 0.0
        %1250 = vmatprep.subr.mxu0 0.0
        %1251 = vmatpush2.xpose.msra.mxu0 0.0
        %1252 = vmatprep.subr.mxu0 0.0
        %1253 = vmatpush2.xpose.msra.mxu0 0.0
        %1254 = vmatprep.subr.mxu0 0.0
        %1255 = vmatpush2.xpose.msra.mxu0 0.0
        %1256 = vmatprep.subr.mxu0 0.0
        %1257 = vmatpush2.xpose.msra.mxu0 0.0
        %1258 = vmatprep.subr.mxu0 0.0
        %1259 = vmatpush2.xpose.msra.mxu0 0.0
        %1260 = vmatprep.subr.mxu0 0.0
        %1261 = vmatpush2.xpose.msra.mxu0 0.0
        %1262 = vmatprep.subr.mxu0 0.0
        %1263 = vmatpush2.xpose.msra.mxu0 0.0
        %1264 = vmatprep.subr.mxu0 0.0
        %1265 = vmatpush2.xpose.msra.mxu0 0.0
        %1266 = vmatprep.subr.mxu0 0.0
        %1267 = vmatpush2.xpose.msra.mxu0 0.0
        %1268 = vmatprep.subr.mxu0 0.0
        %1269 = vmatpush2.xpose.msra.mxu0 0.0
        %1270 = vmatprep.subr.mxu0 0.0
        %1271 = vmatpush2.xpose.msra.mxu0 0.0
        %1272 = vmatprep.subr.mxu0 0.0
        %1273 = vmatpush2.xpose.msra.mxu0 0.0
        %1274 = vmatprep.subr.mxu0 0.0
        %1275 = vmatpush2.xpose.msra.mxu0 0.0
        %1276 = vmatprep.subr.mxu0 0.0
        %1277 = vmatpush2.xpose.msra.mxu0 0.0
        %1278 = vmatprep.mubr.f32.mxu0 0.0
        %1279 = vmatmul.mubr.f32.gmra.mxu0 %v1210
        %v1280 = vpop.f32.mrf.mxu0
        %v1281 = vadd.f32 0.0, %v1280
        %v1282 = vpop.f32.mrf.mxu0
        %1283 = vdwg.mxu0
        %v1284 = vsel %vm570, %v1281, -inf
        %1285 = vmax.xlane.f32.xlu0 %v1284
        %v1286 = vpop.xlane.xlu0 %1285
        %v1287 = vsub.f32 %v1281, %v1286
        %v1288 = vmul.f32 %v1287, 1.442695
        %v1289 = vpow.pop %v1288
        %v1290 = vsel %vm570, %v1289, 0.0
        %1291 = vadd.xlane.f32.xlu0 %v1290
        %v1292 = vpop.xlane.xlu0 %1291
        %1293 = vrot.lane.b32.xlu0 %v473, 32
        %v1294 = vpop.permute.xlu0 %1293
        %v1297 = vsel %vm570, %v1289, 0
        %1299 = vmatprep.subr.mxu0 0.0
        %1300 = vmatpush1.msra.mxu0 0.0
        %1301 = vmatprep.subr.mxu0 0.0
        %1302 = vmatpush1.msra.mxu0 0.0
        %1303 = vmatprep.subr.mxu0 0.0
        %1304 = vmatpush1.msra.mxu0 0.0
        %1305 = vmatprep.subr.mxu0 0.0
        %1306 = vmatpush1.msra.mxu0 0.0
        %1307 = vmatprep.subr.mxu0 0.0
        %1308 = vmatpush1.msra.mxu0 0.0
        %1309 = vmatprep.subr.mxu0 0.0
        %1310 = vmatpush1.msra.mxu0 0.0
        %1311 = vmatprep.subr.mxu0 0.0
        %1312 = vmatpush1.msra.mxu0 0.0
        %1313 = vmatprep.subr.mxu0 0.0
        %1314 = vmatpush1.msra.mxu0 0.0
        %1315 = vmatprep.subr.mxu0 0.0
        %1316 = vmatpush1.msra.mxu0 0.0
        %1317 = vmatprep.subr.mxu0 0.0
        %1318 = vmatpush1.msra.mxu0 0.0
        %1319 = vmatprep.subr.mxu0 0.0
        %1320 = vmatpush1.msra.mxu0 0.0
        %1321 = vmatprep.subr.mxu0 0.0
        %1322 = vmatpush1.msra.mxu0 0.0
        %1323 = vmatprep.subr.mxu0 0.0
        %1324 = vmatpush1.msra.mxu0 0.0
        %1325 = vmatprep.subr.mxu0 0.0
        %1326 = vmatpush1.msra.mxu0 0.0
        %1327 = vmatprep.subr.mxu0 0.0
        %1328 = vmatpush1.msra.mxu0 0.0
        %1329 = vmatprep.subr.mxu0 0.0
        %1330 = vmatpush1.msra.mxu0 %v1294
        %1331 = vmatprep.subr.mxu0 0.0
        %1332 = vmatpush2.msra.mxu0 0.0
        %1333 = vmatprep.subr.mxu0 0.0
        %1334 = vmatpush2.msra.mxu0 0.0
        %1335 = vmatprep.subr.mxu0 0.0
        %1336 = vmatpush2.msra.mxu0 0.0
        %1337 = vmatprep.subr.mxu0 0.0
        %1338 = vmatpush2.msra.mxu0 0.0
        %1339 = vmatprep.subr.mxu0 0.0
        %1340 = vmatpush2.msra.mxu0 0.0
        %1341 = vmatprep.subr.mxu0 0.0
        %1342 = vmatpush2.msra.mxu0 0.0
        %1343 = vmatprep.subr.mxu0 0.0
        %1344 = vmatpush2.msra.mxu0 0.0
        %1345 = vmatprep.subr.mxu0 0.0
        %1346 = vmatpush2.msra.mxu0 0.0
        %1347 = vmatprep.subr.mxu0 0.0
        %1348 = vmatpush2.msra.mxu0 0.0
        %1349 = vmatprep.subr.mxu0 0.0
        %1350 = vmatpush2.msra.mxu0 0.0
        %1351 = vmatprep.subr.mxu0 0.0
        %1352 = vmatpush2.msra.mxu0 0.0
        %1353 = vmatprep.subr.mxu0 0.0
        %1354 = vmatpush2.msra.mxu0 0.0
        %1355 = vmatprep.subr.mxu0 0.0
        %1356 = vmatpush2.msra.mxu0 0.0
        %1357 = vmatprep.subr.mxu0 0.0
        %1358 = vmatpush2.msra.mxu0 0.0
        %1359 = vmatprep.subr.mxu0 0.0
        %1360 = vmatpush2.msra.mxu0 0.0
        %1361 = vmatprep.subr.mxu0 0.0
        %1362 = vmatpush2.msra.mxu0 0.0
        %1363 = vmatprep.mubr.f32.mxu0 0.0
        %1364 = vmatmul.mubr.f32.gmra.mxu0 %v1297
        %v1365 = vpop.f32.mrf.mxu0
        %v1366 = vadd.f32 0.0, %v1365
        %v1367 = vpop.f32.mrf.mxu0
        %1368 = vdwg.mxu0
        %v1369 = vrcp.pop %v1292
        %v1370 = vmul.f32 %v1366, %v1369
        %v1372 = vsel %vm493, %v1370, 0
        %1374 = vmatprep.subr.mxu0 0.0
        %1375 = vmatpush1.msra.mxu0 0.0
        %1376 = vmatprep.subr.mxu0 0.0
        %1377 = vmatpush1.msra.mxu0 0.0
        %1378 = vmatprep.subr.mxu0 0.0
        %1379 = vmatpush1.msra.mxu0 0.0
        %1380 = vmatprep.subr.mxu0 0.0
        %1381 = vmatpush1.msra.mxu0 0.0
        %1382 = vmatprep.subr.mxu0 0.0
        %1383 = vmatpush1.msra.mxu0 0.0
        %1384 = vmatprep.subr.mxu0 0.0
        %1385 = vmatpush1.msra.mxu0 0.0
        %1386 = vmatprep.subr.mxu0 0.0
        %1387 = vmatpush1.msra.mxu0 0.0
        %1388 = vmatprep.subr.mxu0 0.0
        %1389 = vmatpush1.msra.mxu0 0.0
        %1390 = vmatprep.subr.mxu0 0.0
        %1391 = vmatpush1.msra.mxu0 0.0
        %1392 = vmatprep.subr.mxu0 0.0
        %1393 = vmatpush1.msra.mxu0 0.0
        %1394 = vmatprep.subr.mxu0 0.0
        %1395 = vmatpush1.msra.mxu0 0.0
        %1396 = vmatprep.subr.mxu0 0.0
        %1397 = vmatpush1.msra.mxu0 0.0
        %1398 = vmatprep.subr.mxu0 0.0
        %1399 = vmatpush1.msra.mxu0 %v491
        %1400 = vmatprep.subr.mxu0 0.0
        %1401 = vmatpush1.msra.mxu0 %v490
        %1402 = vmatprep.subr.mxu0 0.0
        %1403 = vmatpush1.msra.mxu0 %v489
        %1404 = vmatprep.subr.mxu0 0.0
        %1405 = vmatpush1.msra.mxu0 %v488
        %1406 = vmatprep.subr.mxu0 0.0
        %1407 = vmatpush2.msra.mxu0 0.0
        %1408 = vmatprep.subr.mxu0 0.0
        %1409 = vmatpush2.msra.mxu0 0.0
        %1410 = vmatprep.subr.mxu0 0.0
        %1411 = vmatpush2.msra.mxu0 0.0
        %1412 = vmatprep.subr.mxu0 0.0
        %1413 = vmatpush2.msra.mxu0 0.0
        %1414 = vmatprep.subr.mxu0 0.0
        %1415 = vmatpush2.msra.mxu0 0.0
        %1416 = vmatprep.subr.mxu0 0.0
        %1417 = vmatpush2.msra.mxu0 0.0
        %1418 = vmatprep.subr.mxu0 0.0
        %1419 = vmatpush2.msra.mxu0 0.0
        %1420 = vmatprep.subr.mxu0 0.0
        %1421 = vmatpush2.msra.mxu0 0.0
        %1422 = vmatprep.subr.mxu0 0.0
        %1423 = vmatpush2.msra.mxu0 0.0
        %1424 = vmatprep.subr.mxu0 0.0
        %1425 = vmatpush2.msra.mxu0 0.0
        %1426 = vmatprep.subr.mxu0 0.0
        %1427 = vmatpush2.msra.mxu0 0.0
        %1428 = vmatprep.subr.mxu0 0.0
        %1429 = vmatpush2.msra.mxu0 0.0
        %1430 = vmatprep.subr.mxu0 0.0
        %1431 = vmatpush2.msra.mxu0 0.0
        %1432 = vmatprep.subr.mxu0 0.0
        %1433 = vmatpush2.msra.mxu0 0.0
        %1434 = vmatprep.subr.mxu0 0.0
        %1435 = vmatpush2.msra.mxu0 0.0
        %1436 = vmatprep.subr.mxu0 0.0
        %1437 = vmatpush2.msra.mxu0 0.0
        %1438 = vmatprep.mubr.f32.mxu0 0.0
        %1439 = vmatmul.mubr.f32.gmra.mxu0 %v1372
        %v1440 = vpop.f32.mrf.mxu0
        %v1441 = vadd.f32 0.0, %v1440
        %v1442 = vpop.f32.mrf.mxu0
        %1443 = vdwg.mxu0
        %v1444 = vadd.f32 %v1205, %v1441
        %v1446 = vlaneseq
        %v1447 = vshrl.u32 %v1446, 7
        %v1448 = vsub.s32 0, %v1447
        %v1449 = vrot.slane %v492, %v1448
        %v1451 = vadd.f32 %v1444, %v1449
        %1452 = vst [vmem:[%s268] sm:$0xff] %v1451
        %s1453 = sand.u32 %s141, 1
        %s1454 = scalar_lea.sflag [#allocation4], %s1453
        %s1455 = sand.u32 %s141, 1
        %s1456 = smul.addr %s1455, 8
        %s1457 = scalar_lea.vmem [#allocation8], %s1456
        // Predicated region
        $region53: #{tpu_custom_call.1} parent=39 // pred_check
          %p1458 = pneg %p151
        $region54: #{tpu_custom_call.1} parent=39 // pred_check_branch
          %1460 = sbr.rel (%p1458) target = $region56
        $region55: #{tpu_custom_call.1} parent=39 // pred_region
          %s1462 = ssub.s32 128, 128
          %1463 = vsyncadd %s1454, %s1462
          %s1464 = smul.addr %s23, 128
          %s1465 = scalar_lea.hbm %s5, %s1464
          %s1467 = sshll.u32 %s1457, 4
          %s1468 = int_to_ptr.vmem [resolvable:$true] %s1467
          %1470 = dma.vmem_to_hbm [thread:$0]  %s1468, 128, %s1465, %s1454
        $region56: #{tpu_custom_call.1} parent=39 // pred_fallthru
          _
      $region40: #{tpu_custom_call.1} parent=5 // pred_fallthru
        _
      %p1471 = scmp.le.s32.totalorder 2, %s18
      // Predicated region
      $region57: #{tpu_custom_call.1} parent=5 // pred_check
        %p1472 = pneg %p1471
      $region58: #{tpu_custom_call.1} parent=5 // pred_check_branch
        %1474 = sbr.rel (%p1472) target = $region60
      $region59: #{tpu_custom_call.1} parent=5 // pred_region
        %s1475 = ssub.s32 %s18, 2
        // Predicated region
        $region61: #{tpu_custom_call.1} parent=59 // pred_check
          %p1476 = pneg %p157
        $region62: #{tpu_custom_call.1} parent=59 // pred_check_branch
          %1478 = sbr.rel (%p1476) target = $region64
        $region63: #{tpu_custom_call.1} parent=59 // pred_region
          %s1479 = sand.u32 %s142, 1
          %s1480 = scalar_lea.sflag [#allocation4], %s1479
          %s1481 = sand.u32 %s142, 1
          %s1482 = smul.addr %s1481, 8
          %s1483 = scalar_lea.vmem [#allocation8], %s1482
          %1484 = dma.done %s1480, 128
        $region64: #{tpu_custom_call.1} parent=59 // pred_fallthru
          _
      $region60: #{tpu_custom_call.1} parent=5 // pred_fallthru
        _
    $region6: #{tpu_custom_call.1} parent=1 // loop_footer
      %s22 = sadd.s32 1, %s18
    $region7: #{tpu_custom_call.1} parent=1 // loop_footer_branch
      %17 = sbr.rel target = $region3
    $region8: #{tpu_custom_call.1} parent=1 // loop_exit
      _
    %1485 = vsyncpa [#allocation3], 1
    %s1486 = scalar_lea.sflag [#allocation3], 1
    %1487 = vsyncpa %s1486, 1
    %1488 = vsyncpa [#allocation6], 1
    %1489 = vsyncpa [#allocation4], 1
    %s1490 = scalar_lea.sflag [#allocation4], 1
    %1491 = vsyncpa %s1490, 1

</llo_original>
